<compile_context>
chip_gen: v6e
topology: v6e:2x2x1
jax: 0.10.0
libtpu: 0.0.40
codegen_flags: <defaults>
</compile_context>

<pallas_src>
import functools

import jax
import jax.numpy as jnp
from jax.experimental import pallas as pl
from jax.experimental.pallas import tpu as pltpu

IN_FEAT = 114          # per-branch feature count  (x[:, :114] / x[:, 114:228])
IN_PAD = 128           # zero-padded K for lane alignment (exact: pads contribute 0)
HIDDEN = 64            # hidden_size implied by img[:, :64] feeding fc4
IMG_LEN = HIDDEN + 1   # fc5 in = 3H+1 = 2H + IMG_LEN  ->  IMG_LEN = H + 1
IMG_PAD = 128

W_ROWS = 272           # merged weight slab rows (>=257, multiple of 16 for bf16 tiles)
W_LANES = 3 * 128      # lanes: [0:256] LSTM, [256:320] fc1, [320:328] heads


def _time_action_kernel(x_ref, img_ref, w_ref, out_ref):
    H = HIDDEN
    seq = x_ref.shape[1] // 2        # PyTorch batch dim == LSTM time dim

    # --- resident merged weight slab (bf16), sliced once per grid step -------------
    # lanes 0:256   : LSTM  -> rows 0:64 Wih (H,4H), 64:128 Whh (H,4H), row 128 bias
    # lanes 256:320 : fc1   -> rows 0:128 W1 (K zero-padded), row 128 b1
    # lanes 320:328 : heads -> rows 0:64 hA part, 64:128 hB part, 128:256 img part,
    #                          row 256 biases; cols 0:2 yA, 2:4 yB, 4:6 yC, 6:8 y
    wih = w_ref[0:H, 0:4 * H]                                     # (64, 256) bf16
    whh = w_ref[H:2 * H, 0:4 * H]                                 # (64, 256) bf16
    bg = w_ref[2 * H:2 * H + 1, 0:4 * H].astype(jnp.float32)      # (1, 256)  f32
    w1 = w_ref[0:IN_PAD, 4 * H:4 * H + H]                         # (128, 64) bf16
    b1 = w_ref[IN_PAD:IN_PAD + 1, 4 * H:4 * H + H].astype(jnp.float32)   # (1, 64)
    hb = 4 * H + H                                                # 320
    wha = w_ref[0:H, hb:hb + 8]                                   # (64, 8)  bf16
    whb = w_ref[H:2 * H, hb:hb + 8]                               # (64, 8)  bf16
    wimg = w_ref[2 * H:2 * H + IMG_PAD, hb:hb + 8]                # (128, 8) bf16
    bh = w_ref[2 * H + IMG_PAD:2 * H + IMG_PAD + 1, hb:hb + 8].astype(jnp.float32)

    # --- fc1 -> ReLU for BOTH branches at once (rows interleaved [A_t, B_t, ...]) --
    x = x_ref[0]                                                  # (2*seq, 128) bf16
    feats = jnp.maximum(
        jnp.dot(x, w1, preferred_element_type=jnp.float32) + b1, 0.0)     # (2*seq,64)

    # Hoisted input-side pre-activations (+ combined LSTM bias) for all steps.
    ih = jnp.dot(feats.astype(jnp.bfloat16), wih,
                 preferred_element_type=jnp.float32) + bg                 # (2*seq,256)

    # --- batched recurrence: row 0 = branch A, row 1 = branch B (f32 state) --------
    h = jnp.zeros((2, H), jnp.float32)
    c = jnp.zeros((2, H), jnp.float32)
    for t in range(seq):                          # seq is small & static -> unroll
        pre = ih[2 * t:2 * t + 2, :] + jnp.dot(
            h.astype(jnp.bfloat16), whh, preferred_element_type=jnp.float32)
        # gate order matches PyTorch: i, f, g, o.  One full-vreg sigmoid; i/f/o are
        # lane slices of it, g is the only extra tanh push.
        sg = jax.nn.sigmoid(pre)                                  # (2, 256)
        i_g = sg[:, 0:H]
        f_g = sg[:, H:2 * H]
        o_g = sg[:, 3 * H:4 * H]
        g_g = jnp.tanh(pre[:, 2 * H:3 * H])
        c = f_g * c + i_g * g_g
        h = o_g * jnp.tanh(c)                     # row0 == hA[:, -1, :], row1 == hB

    # --- fused heads: cols 0:2 yA, 2:4 yB, 4:6 yC, 6:8 y ---------------------------
    hb16 = h.astype(jnp.bfloat16)
    img = img_ref[0]                                              # (1, 128) bf16
    out_ref[0] = (
        jnp.dot(hb16[0:1, :], wha, preferred_element_type=jnp.float32)
        + jnp.dot(hb16[1:2, :], whb, preferred_element_type=jnp.float32)
        + jnp.dot(img, wimg, preferred_element_type=jnp.float32)
        + bh)


@jax.jit
def time_action_predict(x, img, w_slab):
    """x: (N, bs, 228) f32, img: (N, 65) f32. Returns (yA, yB, yC, y), each (N, 2)."""
    n_samples, bs, _ = x.shape

    # Branch interleave is exactly a reshape: row t of x = [A_t | B_t]  ->
    # rows [A_t0, B_t0, A_t1, B_t1, ...] of (2*bs, 114). One pad to 128 lanes (exact:
    # W1's padded rows are zero). Ship as bf16 to halve the per-sample DMA bytes.
    x_int = x.reshape(n_samples, 2 * bs, IN_FEAT)
    x_int = jnp.pad(x_int, ((0, 0), (0, 0), (0, IN_PAD - IN_FEAT))).astype(jnp.bfloat16)
    # img.unsqueeze(0), zero-padded to a full lane tile (exact: pads hit zero rows).
    img2d = jnp.pad(img[:, None, :],
                    ((0, 0), (0, 0), (0, IMG_PAD - IMG_LEN))).astype(jnp.bfloat16)

    out8 = pl.pallas_call(
        _time_action_kernel,
        out_shape=jax.ShapeDtypeStruct((n_samples, 1, 8), jnp.float32),
        grid=(n_samples,),
        in_specs=[
            pl.BlockSpec((1, 2 * bs, IN_PAD), lambda n: (n, 0, 0)),
            pl.BlockSpec((1, 1, IMG_PAD), lambda n: (n, 0, 0)),
            # constant block index -> weight slab DMA'd once, VMEM-resident for all n
            pl.BlockSpec((W_ROWS, W_LANES), lambda n: (0, 0)),
        ],
        out_specs=pl.BlockSpec((1, 1, 8), lambda n: (n, 0, 0)),
        compiler_params=pltpu.CompilerParams(dimension_semantics=("parallel",)),
    )(x_int, img2d, w_slab)

    out8 = out8.reshape(n_samples, 8)
    return out8[:, 0:2], out8[:, 2:4], out8[:, 4:6], out8[:, 6:8]


def init_params(key):
    """Deterministic synthetic parameters (PyTorch-style uniform(-1/sqrt(fan_in)))."""
    ks = jax.random.split(key, 12)

    def u(k, shape, fan_in):
        bound = 1.0 / float(fan_in) ** 0.5
        return jax.random.uniform(k, shape, jnp.float32, -bound, bound)

    w1 = u(ks[0], (IN_FEAT, HIDDEN), IN_FEAT)          # fc1 (in, out)
    b1 = u(ks[1], (HIDDEN,), IN_FEAT)
    # LSTM fused layout: (in, 4H) with gate order i, f, g, o along the 4H axis.
    wih = u(ks[2], (HIDDEN, 4 * HIDDEN), HIDDEN)
    whh = u(ks[3], (HIDDEN, 4 * HIDDEN), HIDDEN)
    bg = u(ks[4], (4 * HIDDEN,), HIDDEN) + u(ks[5], (4 * HIDDEN,), HIDDEN)  # b_ih+b_hh
    w3 = u(ks[6], (HIDDEN, 2), HIDDEN)
    b3 = u(ks[7], (2,), HIDDEN)
    w4 = u(ks[8], (HIDDEN, 2), HIDDEN)
    b4 = u(ks[9], (2,), HIDDEN)
    fc5_in = 3 * HIDDEN + 1
    w5 = u(ks[10], (fc5_in, 2), fc5_in)
    b5 = u(ks[11], (2,), fc5_in)
    return (w1, b1, wih, whh, bg, w3, b3, w4, b4, w5, b5)


def pack_params(raw):
    """One-time weight prep: pack everything into a single lane-dense bf16 slab.

    NOTE: assumes PyTorch (4H, in) weights were already transposed to (in, 4H) with
    gate order i, f, g, o (consistent with init_params/reference here); a real
    checkpoint import must match this layout.
    """
    (w1, b1, wih, whh, bg, w3, b3, w4, b4, w5, b5) = raw
    H = HIDDEN
    hb = 4 * H + H                                   # heads start at lane 320

    slab = jnp.zeros((W_ROWS, W_LANES), jnp.float32)
    # LSTM (lanes 0:256)
    slab = (slab.at[0:H, 0:4 * H].set(wih)
                .at[H:2 * H, 0:4 * H].set(whh)
                .at[2 * H, 0:4 * H].set(bg))
    # fc1 (lanes 256:320)
    slab = (slab.at[0:IN_FEAT, 4 * H:4 * H + H].set(w1)
                .at[IN_PAD, 4 * H:4 * H + H].set(b1))
    # heads (lanes 320:328): cols 0:2 yA, 2:4 yB, 4:6 yC, 6:8 y; bias row at 256.
    slab = (slab
            .at[0:H, hb + 0:hb + 2].set(w3)                           # yA = hA @ W3
            .at[0:H, hb + 6:hb + 8].set(w5[0:H])                      # y += hA @ W5[:64]
            .at[H:2 * H, hb + 2:hb + 4].set(w3)                       # yB = hB @ W3
            .at[H:2 * H, hb + 6:hb + 8].set(w5[H:2 * H])              # y += hB @ W5[64:128]
            .at[2 * H:3 * H, hb + 4:hb + 6].set(w4)                   # yC = img[:64] @ W4
            .at[2 * H:2 * H + IMG_LEN, hb + 6:hb + 8].set(w5[2 * H:]) # y += img @ W5[128:193]
            .at[2 * H + IMG_PAD, hb + 0:hb + 2].set(b3)
            .at[2 * H + IMG_PAD, hb + 2:hb + 4].set(b3)
            .at[2 * H + IMG_PAD, hb + 4:hb + 6].set(b4)
            .at[2 * H + IMG_PAD, hb + 6:hb + 8].set(b5))
    return slab.astype(jnp.bfloat16)


def reference(x, img, raw):
    """Pure-JAX single-sample reference (f32, HIGHEST) with identical math."""
    (w1, b1, wih, whh, bg, w3, b3, w4, b4, w5, b5) = raw
    hi = jax.lax.Precision.HIGHEST
    H = HIDDEN

    def branch(xp):                                  # xp: (bs, 114)
        feats = jnp.maximum(jnp.dot(xp, w1, precision=hi) + b1, 0.0)
        h = jnp.zeros((1, H), jnp.float32)
        c = jnp.zeros((1, H), jnp.float32)
        for t in range(xp.shape[0]):
            pre = (jnp.dot(feats[t:t + 1], wih, precision=hi)
                   + jnp.dot(h, whh, precision=hi) + bg)
            i_g = jax.nn.sigmoid(pre[:, 0:H])
            f_g = jax.nn.sigmoid(pre[:, H:2 * H])
            g_g = jnp.tanh(pre[:, 2 * H:3 * H])
            o_g = jax.nn.sigmoid(pre[:, 3 * H:4 * H])
            c = f_g * c + i_g * g_g
            h = o_g * jnp.tanh(c)
        return h

    h_a = branch(x[:, :IN_FEAT])
    h_b = branch(x[:, IN_FEAT:2 * IN_FEAT])
    img2 = img[None, :]                              # (1, 65)
    y_a = jnp.dot(h_a, w3, precision=hi) + b3
    y_b = jnp.dot(h_b, w3, precision=hi) + b3
    y_c = jnp.dot(img2[:, :H], w4, precision=hi) + b4
    hcat = jnp.concatenate([h_a, h_b, img2], axis=-1)
    y = jnp.dot(hcat, w5, precision=hi) + b5
    return y_a, y_b, y_c, y


if __name__ == "__main__":
    key = jax.random.PRNGKey(0)
    k_x, k_img, k_p = jax.random.split(key, 3)

    n_samples = 4                            # independent forward passes (grid axis)
    bs = 8                                   # batch dim of x == LSTM sequence length
    x = jax.random.normal(k_x, (n_samples, bs, 2 * IN_FEAT), jnp.float32)
    img = jax.random.normal(k_img, (n_samples, IMG_LEN), jnp.float32)
    raw = init_params(k_p)
    w_slab = pack_params(raw)

    outs = jax.block_until_ready(time_action_predict(x, img, w_slab))

    for o in outs:
        assert o.shape == (n_samples, 2) and o.dtype == jnp.float32
    # bf16 MXU operands (f32 accumulation/state) -> slightly looser tolerance.
    for n in range(n_samples):
        refs = reference(x[n], img[n], raw)
        for o, r in zip(outs, refs):
            assert bool(jnp.allclose(o[n:n + 1], r, atol=2e-2, rtol=2e-2)), (n, o[n], r)

    print("KERNEL_OK")
</pallas_src>

<mosaic_0001>
module attributes {stable_mosaic.version = 11 : i64} {
  func.func @_time_action_kernel(%arg0: i32, %arg1: memref<1x16x128xbf16, #tpu.memory_space<vmem>>, %arg2: memref<1x1x128xbf16, #tpu.memory_space<vmem>>, %arg3: memref<272x384xbf16, #tpu.memory_space<vmem>>, %arg4: memref<1x1x8xf32, #tpu.memory_space<vmem>>) attributes {dimension_semantics = [#tpu.dimension_semantics<parallel>], iteration_bounds = array<i64: 4>, scalar_prefetch = 0 : i64, scratch_operands = 0 : i64, tpu.core_type = #tpu.core_type<tc>, window_params = [{transform_indices = @transform_0, window_bounds = array<i64: 1, 16, 128>}, {transform_indices = @transform_1, window_bounds = array<i64: 1, 1, 128>}, {pipeline_mode = #tpu.pipeline_mode<synchronous>, transform_indices = @transform_2, window_bounds = array<i64: 272, 384>}, {transform_indices = @transform_3, window_bounds = array<i64: 1, 1, 8>}]} {
    %c0 = arith.constant 0 : index
    %c0_0 = arith.constant 0 : index
    %0 = vector.load %arg3[%c0, %c0_0] : memref<272x384xbf16, #tpu.memory_space<vmem>>, vector<64x256xbf16>
    %c64 = arith.constant 64 : index
    %c0_1 = arith.constant 0 : index
    %1 = vector.load %arg3[%c64, %c0_1] : memref<272x384xbf16, #tpu.memory_space<vmem>>, vector<64x256xbf16>
    %c128 = arith.constant 128 : index
    %c0_2 = arith.constant 0 : index
    %2 = vector.load %arg3[%c128, %c0_2] : memref<272x384xbf16, #tpu.memory_space<vmem>>, vector<1x256xbf16>
    %3 = arith.extf %2 : vector<1x256xbf16> to vector<1x256xf32>
    %c0_3 = arith.constant 0 : index
    %c256 = arith.constant 256 : index
    %4 = vector.load %arg3[%c0_3, %c256] : memref<272x384xbf16, #tpu.memory_space<vmem>>, vector<128x64xbf16>
    %c128_4 = arith.constant 128 : index
    %c256_5 = arith.constant 256 : index
    %5 = vector.load %arg3[%c128_4, %c256_5] : memref<272x384xbf16, #tpu.memory_space<vmem>>, vector<1x64xbf16>
    %6 = arith.extf %5 : vector<1x64xbf16> to vector<1x64xf32>
    %c0_6 = arith.constant 0 : index
    %c320 = arith.constant 320 : index
    %7 = vector.load %arg3[%c0_6, %c320] : memref<272x384xbf16, #tpu.memory_space<vmem>>, vector<64x8xbf16>
    %c64_7 = arith.constant 64 : index
    %c320_8 = arith.constant 320 : index
    %8 = vector.load %arg3[%c64_7, %c320_8] : memref<272x384xbf16, #tpu.memory_space<vmem>>, vector<64x8xbf16>
    %c128_9 = arith.constant 128 : index
    %c320_10 = arith.constant 320 : index
    %9 = vector.load %arg3[%c128_9, %c320_10] : memref<272x384xbf16, #tpu.memory_space<vmem>>, vector<128x8xbf16>
    %c256_11 = arith.constant 256 : index
    %c320_12 = arith.constant 320 : index
    %10 = vector.load %arg3[%c256_11, %c320_12] : memref<272x384xbf16, #tpu.memory_space<vmem>>, vector<1x8xbf16>
    %11 = arith.extf %10 : vector<1x8xbf16> to vector<1x8xf32>
    %c0_13 = arith.constant 0 : index
    %c0_14 = arith.constant 0 : index
    %c0_15 = arith.constant 0 : index
    %12 = vector.load %arg1[%c0_13, %c0_14, %c0_15] : memref<1x16x128xbf16, #tpu.memory_space<vmem>>, vector<1x16x128xbf16>
    %13 = vector.shape_cast %12 : vector<1x16x128xbf16> to vector<16x128xbf16>
    %cst = arith.constant dense<0.000000e+00> : vector<16x64xf32>
    %14 = tpu.matmul %13, %4, %cst {dimension_numbers = #tpu.dot_dimension_numbers<[1], [0], [0], [1], [0, 0, 1, 1], [], []>} : vector<16x128xbf16>, vector<128x64xbf16>, vector<16x64xf32> -> vector<16x64xf32>
    %15 = vector.broadcast %6 : vector<1x64xf32> to vector<16x64xf32>
    %16 = arith.addf %14, %15 : vector<16x64xf32>
    %cst_16 = arith.constant 0.000000e+00 : f32
    %17 = vector.broadcast %cst_16 : f32 to vector<16x64xf32>
    %18 = arith.maximumf %16, %17 : vector<16x64xf32>
    %19 = arith.truncf %18 : vector<16x64xf32> to vector<16x64xbf16>
    %cst_17 = arith.constant dense<0.000000e+00> : vector<16x256xf32>
    %20 = tpu.matmul %19, %0, %cst_17 {dimension_numbers = #tpu.dot_dimension_numbers<[1], [0], [0], [1], [0, 0, 1, 1], [], []>} : vector<16x64xbf16>, vector<64x256xbf16>, vector<16x256xf32> -> vector<16x256xf32>
    %21 = vector.broadcast %3 : vector<1x256xf32> to vector<16x256xf32>
    %22 = arith.addf %20, %21 : vector<16x256xf32>
    %cst_18 = arith.constant 0.000000e+00 : f32
    %23 = vector.broadcast %cst_18 : f32 to vector<2x64xf32>
    %cst_19 = arith.constant 0.000000e+00 : f32
    %24 = vector.broadcast %cst_19 : f32 to vector<2x64xf32>
    %25 = vector.extract_strided_slice %22 {offsets = [0, 0], sizes = [2, 256], strides = [1, 1]} : vector<16x256xf32> to vector<2x256xf32>
    %26 = arith.truncf %23 : vector<2x64xf32> to vector<2x64xbf16>
    %cst_20 = arith.constant dense<0.000000e+00> : vector<2x256xf32>
    %27 = tpu.matmul %26, %1, %cst_20 {dimension_numbers = #tpu.dot_dimension_numbers<[1], [0], [0], [1], [0, 0, 1, 1], [], []>} : vector<2x64xbf16>, vector<64x256xbf16>, vector<2x256xf32> -> vector<2x256xf32>
    %28 = arith.addf %25, %27 : vector<2x256xf32>
    %29 = arith.negf %28 : vector<2x256xf32>
    %30 = math.exp %29 : vector<2x256xf32>
    %cst_21 = arith.constant 1.000000e+00 : f32
    %31 = vector.broadcast %cst_21 : f32 to vector<2x256xf32>
    %32 = arith.addf %31, %30 : vector<2x256xf32>
    %33 = arith.divf %31, %32 : vector<2x256xf32>
    %34 = vector.extract_strided_slice %33 {offsets = [0, 0], sizes = [2, 64], strides = [1, 1]} : vector<2x256xf32> to vector<2x64xf32>
    %35 = vector.extract_strided_slice %33 {offsets = [0, 64], sizes = [2, 64], strides = [1, 1]} : vector<2x256xf32> to vector<2x64xf32>
    %36 = vector.extract_strided_slice %33 {offsets = [0, 192], sizes = [2, 64], strides = [1, 1]} : vector<2x256xf32> to vector<2x64xf32>
    %37 = vector.extract_strided_slice %28 {offsets = [0, 128], sizes = [2, 64], strides = [1, 1]} : vector<2x256xf32> to vector<2x64xf32>
    %38 = math.tanh %37 : vector<2x64xf32>
    %39 = arith.mulf %35, %24 : vector<2x64xf32>
    %40 = arith.mulf %34, %38 : vector<2x64xf32>
    %41 = arith.addf %39, %40 : vector<2x64xf32>
    %42 = math.tanh %41 : vector<2x64xf32>
    %43 = arith.mulf %36, %42 : vector<2x64xf32>
    %44 = vector.extract_strided_slice %22 {offsets = [2, 0], sizes = [2, 256], strides = [1, 1]} : vector<16x256xf32> to vector<2x256xf32>
    %45 = arith.truncf %43 : vector<2x64xf32> to vector<2x64xbf16>
    %cst_22 = arith.constant dense<0.000000e+00> : vector<2x256xf32>
    %46 = tpu.matmul %45, %1, %cst_22 {dimension_numbers = #tpu.dot_dimension_numbers<[1], [0], [0], [1], [0, 0, 1, 1], [], []>} : vector<2x64xbf16>, vector<64x256xbf16>, vector<2x256xf32> -> vector<2x256xf32>
    %47 = arith.addf %44, %46 : vector<2x256xf32>
    %48 = arith.negf %47 : vector<2x256xf32>
    %49 = math.exp %48 : vector<2x256xf32>
    %cst_23 = arith.constant 1.000000e+00 : f32
    %50 = vector.broadcast %cst_23 : f32 to vector<2x256xf32>
    %51 = arith.addf %50, %49 : vector<2x256xf32>
    %52 = arith.divf %50, %51 : vector<2x256xf32>
    %53 = vector.extract_strided_slice %52 {offsets = [0, 0], sizes = [2, 64], strides = [1, 1]} : vector<2x256xf32> to vector<2x64xf32>
    %54 = vector.extract_strided_slice %52 {offsets = [0, 64], sizes = [2, 64], strides = [1, 1]} : vector<2x256xf32> to vector<2x64xf32>
    %55 = vector.extract_strided_slice %52 {offsets = [0, 192], sizes = [2, 64], strides = [1, 1]} : vector<2x256xf32> to vector<2x64xf32>
    %56 = vector.extract_strided_slice %47 {offsets = [0, 128], sizes = [2, 64], strides = [1, 1]} : vector<2x256xf32> to vector<2x64xf32>
    %57 = math.tanh %56 : vector<2x64xf32>
    %58 = arith.mulf %54, %41 : vector<2x64xf32>
    %59 = arith.mulf %53, %57 : vector<2x64xf32>
    %60 = arith.addf %58, %59 : vector<2x64xf32>
    %61 = math.tanh %60 : vector<2x64xf32>
    %62 = arith.mulf %55, %61 : vector<2x64xf32>
    %63 = vector.extract_strided_slice %22 {offsets = [4, 0], sizes = [2, 256], strides = [1, 1]} : vector<16x256xf32> to vector<2x256xf32>
    %64 = arith.truncf %62 : vector<2x64xf32> to vector<2x64xbf16>
    %cst_24 = arith.constant dense<0.000000e+00> : vector<2x256xf32>
    %65 = tpu.matmul %64, %1, %cst_24 {dimension_numbers = #tpu.dot_dimension_numbers<[1], [0], [0], [1], [0, 0, 1, 1], [], []>} : vector<2x64xbf16>, vector<64x256xbf16>, vector<2x256xf32> -> vector<2x256xf32>
    %66 = arith.addf %63, %65 : vector<2x256xf32>
    %67 = arith.negf %66 : vector<2x256xf32>
    %68 = math.exp %67 : vector<2x256xf32>
    %cst_25 = arith.constant 1.000000e+00 : f32
    %69 = vector.broadcast %cst_25 : f32 to vector<2x256xf32>
    %70 = arith.addf %69, %68 : vector<2x256xf32>
    %71 = arith.divf %69, %70 : vector<2x256xf32>
    %72 = vector.extract_strided_slice %71 {offsets = [0, 0], sizes = [2, 64], strides = [1, 1]} : vector<2x256xf32> to vector<2x64xf32>
    %73 = vector.extract_strided_slice %71 {offsets = [0, 64], sizes = [2, 64], strides = [1, 1]} : vector<2x256xf32> to vector<2x64xf32>
    %74 = vector.extract_strided_slice %71 {offsets = [0, 192], sizes = [2, 64], strides = [1, 1]} : vector<2x256xf32> to vector<2x64xf32>
    %75 = vector.extract_strided_slice %66 {offsets = [0, 128], sizes = [2, 64], strides = [1, 1]} : vector<2x256xf32> to vector<2x64xf32>
    %76 = math.tanh %75 : vector<2x64xf32>
    %77 = arith.mulf %73, %60 : vector<2x64xf32>
    %78 = arith.mulf %72, %76 : vector<2x64xf32>
    %79 = arith.addf %77, %78 : vector<2x64xf32>
    %80 = math.tanh %79 : vector<2x64xf32>
    %81 = arith.mulf %74, %80 : vector<2x64xf32>
    %82 = vector.extract_strided_slice %22 {offsets = [6, 0], sizes = [2, 256], strides = [1, 1]} : vector<16x256xf32> to vector<2x256xf32>
    %83 = arith.truncf %81 : vector<2x64xf32> to vector<2x64xbf16>
    %cst_26 = arith.constant dense<0.000000e+00> : vector<2x256xf32>
    %84 = tpu.matmul %83, %1, %cst_26 {dimension_numbers = #tpu.dot_dimension_numbers<[1], [0], [0], [1], [0, 0, 1, 1], [], []>} : vector<2x64xbf16>, vector<64x256xbf16>, vector<2x256xf32> -> vector<2x256xf32>
    %85 = arith.addf %82, %84 : vector<2x256xf32>
    %86 = arith.negf %85 : vector<2x256xf32>
    %87 = math.exp %86 : vector<2x256xf32>
    %cst_27 = arith.constant 1.000000e+00 : f32
    %88 = vector.broadcast %cst_27 : f32 to vector<2x256xf32>
    %89 = arith.addf %88, %87 : vector<2x256xf32>
    %90 = arith.divf %88, %89 : vector<2x256xf32>
    %91 = vector.extract_strided_slice %90 {offsets = [0, 0], sizes = [2, 64], strides = [1, 1]} : vector<2x256xf32> to vector<2x64xf32>
    %92 = vector.extract_strided_slice %90 {offsets = [0, 64], sizes = [2, 64], strides = [1, 1]} : vector<2x256xf32> to vector<2x64xf32>
    %93 = vector.extract_strided_slice %90 {offsets = [0, 192], sizes = [2, 64], strides = [1, 1]} : vector<2x256xf32> to vector<2x64xf32>
    %94 = vector.extract_strided_slice %85 {offsets = [0, 128], sizes = [2, 64], strides = [1, 1]} : vector<2x256xf32> to vector<2x64xf32>
    %95 = math.tanh %94 : vector<2x64xf32>
    %96 = arith.mulf %92, %79 : vector<2x64xf32>
    %97 = arith.mulf %91, %95 : vector<2x64xf32>
    %98 = arith.addf %96, %97 : vector<2x64xf32>
    %99 = math.tanh %98 : vector<2x64xf32>
    %100 = arith.mulf %93, %99 : vector<2x64xf32>
    %101 = vector.extract_strided_slice %22 {offsets = [8, 0], sizes = [2, 256], strides = [1, 1]} : vector<16x256xf32> to vector<2x256xf32>
    %102 = arith.truncf %100 : vector<2x64xf32> to vector<2x64xbf16>
    %cst_28 = arith.constant dense<0.000000e+00> : vector<2x256xf32>
    %103 = tpu.matmul %102, %1, %cst_28 {dimension_numbers = #tpu.dot_dimension_numbers<[1], [0], [0], [1], [0, 0, 1, 1], [], []>} : vector<2x64xbf16>, vector<64x256xbf16>, vector<2x256xf32> -> vector<2x256xf32>
    %104 = arith.addf %101, %103 : vector<2x256xf32>
    %105 = arith.negf %104 : vector<2x256xf32>
    %106 = math.exp %105 : vector<2x256xf32>
    %cst_29 = arith.constant 1.000000e+00 : f32
    %107 = vector.broadcast %cst_29 : f32 to vector<2x256xf32>
    %108 = arith.addf %107, %106 : vector<2x256xf32>
    %109 = arith.divf %107, %108 : vector<2x256xf32>
    %110 = vector.extract_strided_slice %109 {offsets = [0, 0], sizes = [2, 64], strides = [1, 1]} : vector<2x256xf32> to vector<2x64xf32>
    %111 = vector.extract_strided_slice %109 {offsets = [0, 64], sizes = [2, 64], strides = [1, 1]} : vector<2x256xf32> to vector<2x64xf32>
    %112 = vector.extract_strided_slice %109 {offsets = [0, 192], sizes = [2, 64], strides = [1, 1]} : vector<2x256xf32> to vector<2x64xf32>
    %113 = vector.extract_strided_slice %104 {offsets = [0, 128], sizes = [2, 64], strides = [1, 1]} : vector<2x256xf32> to vector<2x64xf32>
    %114 = math.tanh %113 : vector<2x64xf32>
    %115 = arith.mulf %111, %98 : vector<2x64xf32>
    %116 = arith.mulf %110, %114 : vector<2x64xf32>
    %117 = arith.addf %115, %116 : vector<2x64xf32>
    %118 = math.tanh %117 : vector<2x64xf32>
    %119 = arith.mulf %112, %118 : vector<2x64xf32>
    %120 = vector.extract_strided_slice %22 {offsets = [10, 0], sizes = [2, 256], strides = [1, 1]} : vector<16x256xf32> to vector<2x256xf32>
    %121 = arith.truncf %119 : vector<2x64xf32> to vector<2x64xbf16>
    %cst_30 = arith.constant dense<0.000000e+00> : vector<2x256xf32>
    %122 = tpu.matmul %121, %1, %cst_30 {dimension_numbers = #tpu.dot_dimension_numbers<[1], [0], [0], [1], [0, 0, 1, 1], [], []>} : vector<2x64xbf16>, vector<64x256xbf16>, vector<2x256xf32> -> vector<2x256xf32>
    %123 = arith.addf %120, %122 : vector<2x256xf32>
    %124 = arith.negf %123 : vector<2x256xf32>
    %125 = math.exp %124 : vector<2x256xf32>
    %cst_31 = arith.constant 1.000000e+00 : f32
    %126 = vector.broadcast %cst_31 : f32 to vector<2x256xf32>
    %127 = arith.addf %126, %125 : vector<2x256xf32>
    %128 = arith.divf %126, %127 : vector<2x256xf32>
    %129 = vector.extract_strided_slice %128 {offsets = [0, 0], sizes = [2, 64], strides = [1, 1]} : vector<2x256xf32> to vector<2x64xf32>
    %130 = vector.extract_strided_slice %128 {offsets = [0, 64], sizes = [2, 64], strides = [1, 1]} : vector<2x256xf32> to vector<2x64xf32>
    %131 = vector.extract_strided_slice %128 {offsets = [0, 192], sizes = [2, 64], strides = [1, 1]} : vector<2x256xf32> to vector<2x64xf32>
    %132 = vector.extract_strided_slice %123 {offsets = [0, 128], sizes = [2, 64], strides = [1, 1]} : vector<2x256xf32> to vector<2x64xf32>
    %133 = math.tanh %132 : vector<2x64xf32>
    %134 = arith.mulf %130, %117 : vector<2x64xf32>
    %135 = arith.mulf %129, %133 : vector<2x64xf32>
    %136 = arith.addf %134, %135 : vector<2x64xf32>
    %137 = math.tanh %136 : vector<2x64xf32>
    %138 = arith.mulf %131, %137 : vector<2x64xf32>
    %139 = vector.extract_strided_slice %22 {offsets = [12, 0], sizes = [2, 256], strides = [1, 1]} : vector<16x256xf32> to vector<2x256xf32>
    %140 = arith.truncf %138 : vector<2x64xf32> to vector<2x64xbf16>
    %cst_32 = arith.constant dense<0.000000e+00> : vector<2x256xf32>
    %141 = tpu.matmul %140, %1, %cst_32 {dimension_numbers = #tpu.dot_dimension_numbers<[1], [0], [0], [1], [0, 0, 1, 1], [], []>} : vector<2x64xbf16>, vector<64x256xbf16>, vector<2x256xf32> -> vector<2x256xf32>
    %142 = arith.addf %139, %141 : vector<2x256xf32>
    %143 = arith.negf %142 : vector<2x256xf32>
    %144 = math.exp %143 : vector<2x256xf32>
    %cst_33 = arith.constant 1.000000e+00 : f32
    %145 = vector.broadcast %cst_33 : f32 to vector<2x256xf32>
    %146 = arith.addf %145, %144 : vector<2x256xf32>
    %147 = arith.divf %145, %146 : vector<2x256xf32>
    %148 = vector.extract_strided_slice %147 {offsets = [0, 0], sizes = [2, 64], strides = [1, 1]} : vector<2x256xf32> to vector<2x64xf32>
    %149 = vector.extract_strided_slice %147 {offsets = [0, 64], sizes = [2, 64], strides = [1, 1]} : vector<2x256xf32> to vector<2x64xf32>
    %150 = vector.extract_strided_slice %147 {offsets = [0, 192], sizes = [2, 64], strides = [1, 1]} : vector<2x256xf32> to vector<2x64xf32>
    %151 = vector.extract_strided_slice %142 {offsets = [0, 128], sizes = [2, 64], strides = [1, 1]} : vector<2x256xf32> to vector<2x64xf32>
    %152 = math.tanh %151 : vector<2x64xf32>
    %153 = arith.mulf %149, %136 : vector<2x64xf32>
    %154 = arith.mulf %148, %152 : vector<2x64xf32>
    %155 = arith.addf %153, %154 : vector<2x64xf32>
    %156 = math.tanh %155 : vector<2x64xf32>
    %157 = arith.mulf %150, %156 : vector<2x64xf32>
    %158 = vector.extract_strided_slice %22 {offsets = [14, 0], sizes = [2, 256], strides = [1, 1]} : vector<16x256xf32> to vector<2x256xf32>
    %159 = arith.truncf %157 : vector<2x64xf32> to vector<2x64xbf16>
    %cst_34 = arith.constant dense<0.000000e+00> : vector<2x256xf32>
    %160 = tpu.matmul %159, %1, %cst_34 {dimension_numbers = #tpu.dot_dimension_numbers<[1], [0], [0], [1], [0, 0, 1, 1], [], []>} : vector<2x64xbf16>, vector<64x256xbf16>, vector<2x256xf32> -> vector<2x256xf32>
    %161 = arith.addf %158, %160 : vector<2x256xf32>
    %162 = arith.negf %161 : vector<2x256xf32>
    %163 = math.exp %162 : vector<2x256xf32>
    %cst_35 = arith.constant 1.000000e+00 : f32
    %164 = vector.broadcast %cst_35 : f32 to vector<2x256xf32>
    %165 = arith.addf %164, %163 : vector<2x256xf32>
    %166 = arith.divf %164, %165 : vector<2x256xf32>
    %167 = vector.extract_strided_slice %166 {offsets = [0, 0], sizes = [2, 64], strides = [1, 1]} : vector<2x256xf32> to vector<2x64xf32>
    %168 = vector.extract_strided_slice %166 {offsets = [0, 64], sizes = [2, 64], strides = [1, 1]} : vector<2x256xf32> to vector<2x64xf32>
    %169 = vector.extract_strided_slice %166 {offsets = [0, 192], sizes = [2, 64], strides = [1, 1]} : vector<2x256xf32> to vector<2x64xf32>
    %170 = vector.extract_strided_slice %161 {offsets = [0, 128], sizes = [2, 64], strides = [1, 1]} : vector<2x256xf32> to vector<2x64xf32>
    %171 = math.tanh %170 : vector<2x64xf32>
    %172 = arith.mulf %168, %155 : vector<2x64xf32>
    %173 = arith.mulf %167, %171 : vector<2x64xf32>
    %174 = arith.addf %172, %173 : vector<2x64xf32>
    %175 = math.tanh %174 : vector<2x64xf32>
    %176 = arith.mulf %169, %175 : vector<2x64xf32>
    %177 = arith.truncf %176 : vector<2x64xf32> to vector<2x64xbf16>
    %c0_36 = arith.constant 0 : index
    %c0_37 = arith.constant 0 : index
    %c0_38 = arith.constant 0 : index
    %178 = vector.load %arg2[%c0_36, %c0_37, %c0_38] : memref<1x1x128xbf16, #tpu.memory_space<vmem>>, vector<1x1x128xbf16>
    %179 = vector.shape_cast %178 : vector<1x1x128xbf16> to vector<1x128xbf16>
    %180 = vector.extract_strided_slice %177 {offsets = [0, 0], sizes = [1, 64], strides = [1, 1]} : vector<2x64xbf16> to vector<1x64xbf16>
    %cst_39 = arith.constant dense<0.000000e+00> : vector<1x8xf32>
    %181 = tpu.matmul %180, %7, %cst_39 {dimension_numbers = #tpu.dot_dimension_numbers<[1], [0], [0], [1], [0, 0, 1, 1], [], []>} : vector<1x64xbf16>, vector<64x8xbf16>, vector<1x8xf32> -> vector<1x8xf32>
    %182 = vector.extract_strided_slice %177 {offsets = [1, 0], sizes = [1, 64], strides = [1, 1]} : vector<2x64xbf16> to vector<1x64xbf16>
    %cst_40 = arith.constant dense<0.000000e+00> : vector<1x8xf32>
    %183 = tpu.matmul %182, %8, %cst_40 {dimension_numbers = #tpu.dot_dimension_numbers<[1], [0], [0], [1], [0, 0, 1, 1], [], []>} : vector<1x64xbf16>, vector<64x8xbf16>, vector<1x8xf32> -> vector<1x8xf32>
    %184 = arith.addf %181, %183 : vector<1x8xf32>
    %cst_41 = arith.constant dense<0.000000e+00> : vector<1x8xf32>
    %185 = tpu.matmul %179, %9, %cst_41 {dimension_numbers = #tpu.dot_dimension_numbers<[1], [0], [0], [1], [0, 0, 1, 1], [], []>} : vector<1x128xbf16>, vector<128x8xbf16>, vector<1x8xf32> -> vector<1x8xf32>
    %186 = arith.addf %184, %185 : vector<1x8xf32>
    %187 = arith.addf %186, %11 : vector<1x8xf32>
    %c0_42 = arith.constant 0 : index
    %c0_43 = arith.constant 0 : index
    %c0_44 = arith.constant 0 : index
    %188 = vector.load %arg4[%c0_42, %c0_43, %c0_44] : memref<1x1x8xf32, #tpu.memory_space<vmem>>, vector<1x1x8xf32>
    %189 = vector.shape_cast %188 : vector<1x1x8xf32> to vector<1x8xf32>
    %190 = vector.shape_cast %187 : vector<1x8xf32> to vector<1x1x8xf32>
    tpu.vector_store %arg4[%c0_42, %c0_43, %c0_44], %190 {strides = array<i32>} : memref<1x1x8xf32, #tpu.memory_space<vmem>>, vector<1x1x8xf32>,
    return
  }
  func.func @transform_0(%arg0: i32) -> (i32, i32, i32) {
    %c0_i32 = arith.constant 0 : i32
    %c0_i32_0 = arith.constant 0 : i32
    %c0_i32_1 = arith.constant 0 : i32
    return %arg0, %c0_i32, %c0_i32_0 : i32, i32, i32
  }
  func.func @transform_1(%arg0: i32) -> (i32, i32, i32) {
    %c0_i32 = arith.constant 0 : i32
    %c0_i32_0 = arith.constant 0 : i32
    %c0_i32_1 = arith.constant 0 : i32
    return %arg0, %c0_i32, %c0_i32_0 : i32, i32, i32
  }
  func.func @transform_2(%arg0: i32) -> (i32, i32) {
    %c0_i32 = arith.constant 0 : i32
    %c0_i32_0 = arith.constant 0 : i32
    %c0_i32_1 = arith.constant 0 : i32
    return %c0_i32, %c0_i32_0 : i32, i32
  }
  func.func @transform_3(%arg0: i32) -> (i32, i32, i32) {
    %c0_i32 = arith.constant 0 : i32
    %c0_i32_0 = arith.constant 0 : i32
    %c0_i32_1 = arith.constant 0 : i32
    return %arg0, %c0_i32, %c0_i32_0 : i32, i32, i32
  }
}

</mosaic_0001>

<llo_original>
// kernel: time_action_predict.1
$region0: #{time_action_predict.1}
  #allocation0 [shape = 'u32[]', space=smem, size = 0x4, offset = 0x4, fixed_abs, tag = 'smem constant byte address 0x4 - core index']
  #allocation1 [shape = 'u32[144,128]{1,0:T(1,128)}', space=vmem, size = 0x12000, scoped, tag = 'internal scratch']
  %s0 = inlined_call_operand.vmem [shape: bf16[4,16,128], index: 0, kind: input, shape index: {}]
  %s1 = inlined_call_operand.vmem [shape: bf16[4,1,128], index: 1, kind: input, shape index: {}]
  %s2 = inlined_call_operand.hbm [shape: bf16[272,384], index: 2, kind: input, shape index: {}]
  %s3 = inlined_call_operand.vmem [shape: f32[4,1,8], index: 3, kind: output, shape index: {}]
  %s4 = sld [smem:[#allocation0]]
  $region49: #{time_action_predict.1} parent=0
    _
  %s6 = ssub.s32 1, %s4
  %s7 = scalar_select 0, %s6, %s4
  $region1: #{time_action_predict.1} parent=0
    #allocation2 [shape = 'u8[208896]{0}', space=vmem, size = 0x33000, scoped, tag = 'input window, operand 2, single buffered']
    #allocation3 [shape = 's32[2]{0}', space=sflag, size = 0x8, scoped, tag = 'scoped memory for time_action_predict.1']
    %8 = vsyncpa [#allocation3], 0
    loop: start=0, step=1, limit=6
    $region2: #{time_action_predict.1} parent=1 // loop_pre_header
      _
    $region3: #{time_action_predict.1} parent=1 // loop_header
      %s10 = sphi 0, %s14
      %p11 = scmp.ge.s32.totalorder %s10, 6
      %s20 = sphi 0, %s22
      %s23 = sphi 0, %s20
      %s24 = sphi 0, %s23
      %s40 = sphi 0, %s24
      %s46 = sphi 0, %s48
      %s49 = sphi 0, %s46
      %s50 = sphi 0, %s49
      %s66 = sphi 0, %s50
      %s70 = sphi 0, %s70
      %s72 = sphi 0, %s70
      %s73 = sphi 0, %s72
      %s87 = sphi 0, %s73
      %s93 = sphi 0, %s95
      %s96 = sphi 0, %s93
      %s97 = sphi 0, %s96
      %s113 = sphi 0, %s97
    $region4: #{time_action_predict.1} parent=1 // loop_header_branch
      %13 = sbr.rel (%p11) target = $region8
    $region5: #{time_action_predict.1} parent=1 // loop_body
      %s15 = ssub.s32 %s10, 1
      %s16 = ssub.s32 %s10, 2
      %s17 = sadd.s32 %s10, 1
      %s18 = ssub.s32 %s10, %s17
      %p19 = scmp.eq.s32.totalorder %s18, 0
      %s21 = sadd.s32 %s20, 1
      %s22 = scalar_select %p19, %s20, %s21
      %p25 = pneg %p19
      %p26 = scmp.eq.s32.totalorder %s10, 3
      %p27 = por %p25, %p26
      %p28 = scmp.ne.s32.totalorder %s20, %s23
      %p29 = scmp.eq.s32.totalorder %s10, 0
      %p30 = por %p28, %p29
      %p31 = scmp.ne.s32.totalorder %s20, %s23
      %p32 = scmp.eq.s32.totalorder %s15, 3
      %p33 = por %p31, %p32
      %p34 = scmp.ne.s32.totalorder %s23, %s24
      %p35 = scmp.eq.s32.totalorder %s15, 0
      %p36 = por %p34, %p35
      %p37 = scmp.ne.s32.totalorder %s23, %s24
      %p38 = scmp.eq.s32.totalorder %s16, 3
      %p39 = por %p37, %p38
      %p41 = scmp.ne.s32.totalorder %s24, %s40
      %p42 = scmp.eq.s32.totalorder %s16, 0
      %p43 = por %p41, %p42
      %s44 = ssub.s32 %s10, %s17
      %p45 = scmp.eq.s32.totalorder %s44, 0
      %s47 = sadd.s32 %s46, 1
      %s48 = scalar_select %p45, %s46, %s47
      %p51 = pneg %p45
      %p52 = scmp.eq.s32.totalorder %s10, 3
      %p53 = por %p51, %p52
      %p54 = scmp.ne.s32.totalorder %s46, %s49
      %p55 = scmp.eq.s32.totalorder %s10, 0
      %p56 = por %p54, %p55
      %p57 = scmp.ne.s32.totalorder %s46, %s49
      %p58 = scmp.eq.s32.totalorder %s15, 3
      %p59 = por %p57, %p58
      %p60 = scmp.ne.s32.totalorder %s49, %s50
      %p61 = scmp.eq.s32.totalorder %s15, 0
      %p62 = por %p60, %p61
      %p63 = scmp.ne.s32.totalorder %s49, %s50
      %p64 = scmp.eq.s32.totalorder %s16, 3
      %p65 = por %p63, %p64
      %p67 = scmp.ne.s32.totalorder %s50, %s66
      %p68 = scmp.eq.s32.totalorder %s16, 0
      %p69 = por %p67, %p68
      %s71 = sadd.s32 %s70, 1
      %p74 = scmp.eq.s32.totalorder %s10, 3
      %p75 = scmp.ne.s32.totalorder %s70, %s72
      %p76 = scmp.eq.s32.totalorder %s10, 0
      %p77 = por %p75, %p76
      %p78 = scmp.ne.s32.totalorder %s70, %s72
      %p79 = scmp.eq.s32.totalorder %s15, 3
      %p80 = por %p78, %p79
      %p81 = scmp.ne.s32.totalorder %s72, %s73
      %p82 = scmp.eq.s32.totalorder %s15, 0
      %p83 = por %p81, %p82
      %p84 = scmp.ne.s32.totalorder %s72, %s73
      %p85 = scmp.eq.s32.totalorder %s16, 3
      %p86 = por %p84, %p85
      %p88 = scmp.ne.s32.totalorder %s73, %s87
      %p89 = scmp.eq.s32.totalorder %s16, 0
      %p90 = por %p88, %p89
      %s91 = ssub.s32 %s10, %s17
      %p92 = scmp.eq.s32.totalorder %s91, 0
      %s94 = sadd.s32 %s93, 1
      %s95 = scalar_select %p92, %s93, %s94
      %p98 = pneg %p92
      %p99 = scmp.eq.s32.totalorder %s10, 3
      %p100 = por %p98, %p99
      %p101 = scmp.ne.s32.totalorder %s93, %s96
      %p102 = scmp.eq.s32.totalorder %s10, 0
      %p103 = por %p101, %p102
      %p104 = scmp.ne.s32.totalorder %s93, %s96
      %p105 = scmp.eq.s32.totalorder %s15, 3
      %p106 = por %p104, %p105
      %p107 = scmp.ne.s32.totalorder %s96, %s97
      %p108 = scmp.eq.s32.totalorder %s15, 0
      %p109 = por %p107, %p108
      %p110 = scmp.ne.s32.totalorder %s96, %s97
      %p111 = scmp.eq.s32.totalorder %s16, 3
      %p112 = por %p110, %p111
      %p114 = scmp.ne.s32.totalorder %s97, %s113
      %p115 = scmp.eq.s32.totalorder %s16, 0
      %p116 = por %p114, %p115
      %p117 = scmp.le.s32.totalorder 1, %s10
      %p118 = scmp.lt.s32.totalorder %s10, 5
      %p119 = pnand %p117, %p118
      %p120 = pneg %p119
      // Predicated region
      $region9: #{time_action_predict.1} parent=5 // pred_check
        _
      $region10: #{time_action_predict.1} parent=5 // pred_check_branch
        %122 = sbr.rel (%p119) target = $region12
      $region11: #{time_action_predict.1} parent=5 // pred_region
        %s123 = ssub.s32 %s10, 1
        // Predicated region
        $region13: #{time_action_predict.1} parent=11 // pred_check
          %p124 = pneg %p83
        $region14: #{time_action_predict.1} parent=11 // pred_check_branch
          %126 = sbr.rel (%p124) target = $region16
        $region15: #{time_action_predict.1} parent=11 // pred_region
          %s128 = ssub.s32 6528, 6528
          %129 = vsyncadd [#allocation3], %s128
          %s130 = sshll.u32 [#allocation2], 4
          %s131 = int_to_ptr.vmem [resolvable:$true] %s130
          %136 = dma.hbm_to_vmem [thread:$0]  %s2, 6528, %s131, [#allocation3], 192, 192, 12
        $region16: #{time_action_predict.1} parent=11 // pred_fallthru
          _
      $region12: #{time_action_predict.1} parent=5 // pred_fallthru
        _
      %p137 = scmp.lt.s32.totalorder %s10, 4
      // Predicated region
      $region17: #{time_action_predict.1} parent=5 // pred_check
        %p138 = pneg %p137
      $region18: #{time_action_predict.1} parent=5 // pred_check_branch
        %140 = sbr.rel (%p138) target = $region20
      $region19: #{time_action_predict.1} parent=5 // pred_region
        // Predicated region
        $region21: #{time_action_predict.1} parent=19 // pred_check
          %p141 = pneg %p30
        $region22: #{time_action_predict.1} parent=19 // pred_check_branch
          %143 = sbr.rel (%p141) target = $region24
        $region23: #{time_action_predict.1} parent=19 // pred_region
          %p144 = scmp.lt.s32.totalorder %s10, 3
          %s145 = scalar_select %p144, %s10, 3
          %s146 = smul.addr %s145, 2
          %s147 = smul.addr %s146, 4
          %s148 = scalar_lea.vmem %s0, %s147
        $region24: #{time_action_predict.1} parent=19 // pred_fallthru
          _
        // Predicated region
        $region25: #{time_action_predict.1} parent=19 // pred_check
          %p149 = pneg %p56
        $region26: #{time_action_predict.1} parent=19 // pred_check_branch
          %151 = sbr.rel (%p149) target = $region28
        $region27: #{time_action_predict.1} parent=19 // pred_region
          %p152 = scmp.lt.s32.totalorder %s10, 3
          %s153 = scalar_select %p152, %s10, 3
          %s154 = scalar_lea.vmem %s1, %s153
        $region28: #{time_action_predict.1} parent=19 // pred_fallthru
          _
      $region20: #{time_action_predict.1} parent=5 // pred_fallthru
        _
      %p155 = scmp.le.s32.totalorder 1, %s10
      %p156 = scmp.lt.s32.totalorder %s10, 5
      %p157 = pnand %p155, %p156
      %p158 = pneg %p157
      // Predicated region
      $region29: #{time_action_predict.1} parent=5 // pred_check
        _
      $region30: #{time_action_predict.1} parent=5 // pred_check_branch
        %160 = sbr.rel (%p157) target = $region32
      $region31: #{time_action_predict.1} parent=5 // pred_region
        %s161 = ssub.s32 %s10, 1
        // Predicated region
        $region33: #{time_action_predict.1} parent=31 // pred_check
          %p162 = pneg %p83
        $region34: #{time_action_predict.1} parent=31 // pred_check_branch
          %164 = sbr.rel (%p162) target = $region36
        $region35: #{time_action_predict.1} parent=31 // pred_region
          %165 = dma.done [#allocation3], 6528
        $region36: #{time_action_predict.1} parent=31 // pred_fallthru
          _
        %p166 = scmp.lt.s32.totalorder %s15, 3
        %s167 = scalar_select %p166, %s15, 3
        %s168 = smul.addr %s167, 2
        %s169 = smul.addr %s168, 4
        %s170 = scalar_lea.vmem %s0, %s169
        %p171 = pneg %p36
        %p172 = pneg %p33
        %p173 = scmp.lt.s32.totalorder %s15, 3
        %s174 = scalar_select %p173, %s15, 3
        %s175 = scalar_lea.vmem %s1, %s174
        %p176 = pneg %p62
        %p177 = pneg %p59
        %p178 = pneg %p83
        %p179 = pneg %p80
        %p180 = pneg %p109
        %p181 = pneg %p106
        %p182 = scmp.lt.s32.totalorder %s15, 3
        %s183 = scalar_select %p182, %s15, 3
        %s184 = scalar_lea.vmem %s3, %s183
        %p185 = scmp.lt.s32.totalorder %s15, 3
        %s186 = scalar_select %p185, %s15, 3
        %s187 = smul.addr %s186, 2
        %s188 = smul.addr %s187, 4
        %s189 = scalar_lea.vmem %s0, %s188
        %p190 = scmp.lt.s32.totalorder %s15, 3
        %s191 = scalar_select %p190, %s15, 3
        %s192 = scalar_lea.vmem %s1, %s191
        %p193 = scmp.lt.s32.totalorder %s15, 3
        %s194 = scalar_select %p193, %s15, 3
        %s195 = scalar_lea.vmem %s3, %s194
        %v197 = vld [vmem:[#allocation2] sm:$0xff]
        %v198 = vld [vmem:[#allocation2 + $0xc] sm:$0xff]
        %v199 = vld [vmem:[#allocation2 + $0x18] sm:$0xff]
        %v200 = vld [vmem:[#allocation2 + $0x24] sm:$0xff]
        %v201 = vld [vmem:[#allocation2 + $0x30] sm:$0xff]
        %v202 = vld [vmem:[#allocation2 + $0x3c] sm:$0xff]
        %v203 = vld [vmem:[#allocation2 + $0x48] sm:$0xff]
        %v204 = vld [vmem:[#allocation2 + $0x54] sm:$0xff]
        %v205 = vld [vmem:[#allocation2 + $0x60] sm:$0xff]
        %v206 = vld [vmem:[#allocation2 + $0x6c] sm:$0xff]
        %v207 = vld [vmem:[#allocation2 + $0x78] sm:$0xff]
        %v208 = vld [vmem:[#allocation2 + $0x84] sm:$0xff]
        %v209 = vld [vmem:[#allocation2 + $0x90] sm:$0xff]
        %v210 = vld [vmem:[#allocation2 + $0x9c] sm:$0xff]
        %v211 = vld [vmem:[#allocation2 + $0xa8] sm:$0xff]
        %v212 = vld [vmem:[#allocation2 + $0xb4] sm:$0xff]
        %v213 = vld [vmem:[#allocation2 + $0xc0] sm:$0x11]
        %v214 = vunpack.c.l.bf16 %v213
        %v215 = vunpack.c.h.bf16 %v213
        %v216 = vld [vmem:[#allocation2 + $0x8] sm:$0xf]
        %v217 = vld [vmem:[#allocation2 + $0x14] sm:$0xf]
        %v218 = vld [vmem:[#allocation2 + $0x20] sm:$0xf]
        %v219 = vld [vmem:[#allocation2 + $0x2c] sm:$0xf]
        %v220 = vld [vmem:[#allocation2 + $0x38] sm:$0xf]
        %v221 = vld [vmem:[#allocation2 + $0x44] sm:$0xf]
        %v222 = vld [vmem:[#allocation2 + $0x50] sm:$0xf]
        %v223 = vld [vmem:[#allocation2 + $0x5c] sm:$0xf]
        %v224 = vld [vmem:[#allocation2 + $0x68] sm:$0xf]
        %v225 = vld [vmem:[#allocation2 + $0x74] sm:$0xf]
        %v226 = vld [vmem:[#allocation2 + $0x80] sm:$0xf]
        %v227 = vld [vmem:[#allocation2 + $0x8c] sm:$0xf]
        %v228 = vld [vmem:[#allocation2 + $0x98] sm:$0xf]
        %v229 = vld [vmem:[#allocation2 + $0xa4] sm:$0xf]
        %v230 = vld [vmem:[#allocation2 + $0xb0] sm:$0xf]
        %v231 = vld [vmem:[#allocation2 + $0xbc] sm:$0xf]
        %v232 = vld [vmem:[#allocation2 + $0xc8] sm:$0x1]
        %v233 = vunpack.c.l.bf16 %v232
        %v234 = vld [vmem:[#allocation2 + $0xc8] sm:$0xf]
        %v235 = vld [vmem:[#allocation2 + $0xd4] sm:$0xf]
        %v236 = vld [vmem:[#allocation2 + $0xe0] sm:$0xf]
        %v237 = vld [vmem:[#allocation2 + $0xec] sm:$0xf]
        %v238 = vld [vmem:[#allocation2 + $0xf8] sm:$0xf]
        %v239 = vld [vmem:[#allocation2 + $0x104] sm:$0xf]
        %v240 = vld [vmem:[#allocation2 + $0x110] sm:$0xf]
        %v241 = vld [vmem:[#allocation2 + $0x11c] sm:$0xf]
        %v242 = vld [vmem:[#allocation2 + $0x128] sm:$0xf]
        %v243 = vld [vmem:[#allocation2 + $0x134] sm:$0xf]
        %v244 = vld [vmem:[#allocation2 + $0x140] sm:$0xf]
        %v245 = vld [vmem:[#allocation2 + $0x14c] sm:$0xf]
        %v246 = vld [vmem:[#allocation2 + $0x158] sm:$0xf]
        %v247 = vld [vmem:[#allocation2 + $0x164] sm:$0xf]
        %v248 = vld [vmem:[#allocation2 + $0x170] sm:$0xf]
        %v249 = vld [vmem:[#allocation2 + $0x17c] sm:$0xf]
        %v250 = vld [vmem:[#allocation2 + $0x188] sm:$0x1]
        %v251 = vunpack.c.l.bf16 %v250
        %v252 = vld [vmem:[%s189] sm:$0xf]
        %v253 = vld [vmem:[%s189 + $0x4] sm:$0xf]
        %v254 = vlaneseq
        %v255 = vshrl.u32 %v254, 7
        %v256 = vsub.s32 0, %v255
        %v257 = vrot.slane %v233, %v256
        %v260 = vunpack.c.l.b16 %v252
        %v261 = vunpack.c.l.b16 %v253
        %v262 = vpack.c.b16 %v261, %v260
        %v280 = vunpack.c.l.b16 %v216
        %v281 = vunpack.c.l.b16 %v217
        %v282 = vunpack.c.l.b16 %v218
        %v283 = vunpack.c.l.b16 %v219
        %v284 = vunpack.c.l.b16 %v220
        %v285 = vunpack.c.l.b16 %v221
        %v286 = vunpack.c.l.b16 %v222
        %v287 = vunpack.c.l.b16 %v223
        %v288 = vunpack.c.l.b16 %v224
        %v289 = vunpack.c.l.b16 %v225
        %v290 = vunpack.c.l.b16 %v226
        %v291 = vunpack.c.l.b16 %v227
        %v292 = vunpack.c.l.b16 %v228
        %v293 = vunpack.c.l.b16 %v229
        %v294 = vunpack.c.l.b16 %v230
        %v295 = vunpack.c.l.b16 %v231
        %v296 = vpack.c.b16 %v281, %v280
        %v297 = vpack.c.b16 %v283, %v282
        %v298 = vpack.c.b16 %v285, %v284
        %v299 = vpack.c.b16 %v287, %v286
        %v300 = vpack.c.b16 %v289, %v288
        %v301 = vpack.c.b16 %v291, %v290
        %v302 = vpack.c.b16 %v293, %v292
        %v303 = vpack.c.b16 %v295, %v294
        %312 = vmatprep.subr.bf16.mxu0 0
        %313 = vmatpush1.bf16.msra.mxu0 %v303
        %314 = vmatprep.subr.bf16.mxu0 0
        %315 = vmatpush1.bf16.msra.mxu0 %v302
        %316 = vmatprep.subr.bf16.mxu0 0
        %317 = vmatpush1.bf16.msra.mxu0 %v301
        %318 = vmatprep.subr.bf16.mxu0 0
        %319 = vmatpush1.bf16.msra.mxu0 %v300
        %320 = vmatprep.subr.bf16.mxu0 0
        %321 = vmatpush1.bf16.msra.mxu0 %v299
        %322 = vmatprep.subr.bf16.mxu0 0
        %323 = vmatpush1.bf16.msra.mxu0 %v298
        %324 = vmatprep.subr.bf16.mxu0 0
        %325 = vmatpush1.bf16.msra.mxu0 %v297
        %326 = vmatprep.subr.bf16.mxu0 0
        %327 = vmatpush1.bf16.msra.mxu0 %v296
        %328 = vmatprep.subr.bf16.mxu0 0
        %329 = vmatpush2.bf16.msra.mxu0 0
        %330 = vmatprep.subr.bf16.mxu0 0
        %331 = vmatpush2.bf16.msra.mxu0 0
        %332 = vmatprep.subr.bf16.mxu0 0
        %333 = vmatpush2.bf16.msra.mxu0 0
        %334 = vmatprep.subr.bf16.mxu0 0
        %335 = vmatpush2.bf16.msra.mxu0 0
        %336 = vmatprep.subr.bf16.mxu0 0
        %337 = vmatpush2.bf16.msra.mxu0 0
        %338 = vmatprep.subr.bf16.mxu0 0
        %339 = vmatpush2.bf16.msra.mxu0 0
        %340 = vmatprep.subr.bf16.mxu0 0
        %341 = vmatpush2.bf16.msra.mxu0 0
        %342 = vmatprep.subr.bf16.mxu0 0
        %343 = vmatpush2.bf16.msra.mxu0 0
        %344 = vmatprep.mubr.bf16.mxu0 0
        %345 = vmatmul.mubr.bf16.gmra.mxu0 %v262
        %v346 = vpop.f32.mrf.mxu0
        %v347 = vadd.f32 %v257, %v346
        %v348 = vpop.f32.mrf.mxu0
        %v349 = vpop.f32.mrf.mxu0
        %v350 = vadd.f32 %v257, %v349
        %v351 = vpop.f32.mrf.mxu0
        %352 = vdwg.mxu0
        %v353 = vmax.f32 %v347, 0.0
        %v354 = vmax.f32 %v350, 0.0
        %v355 = vpack.c.bf16 %v354, %v353
        %v356 = vlaneseq
        %v357 = vshrl.u32 %v356, 7
        %v358 = vsub.s32 0, %v357
        %v359 = vrot.slane %v214, %v358
        %v360 = vlaneseq
        %v361 = vshrl.u32 %v360, 7
        %v362 = vsub.s32 0, %v361
        %v363 = vrot.slane %v215, %v362
        %v372 = vunpack.c.l.b16 %v197
        %v373 = vunpack.c.h.b16 %v197
        %v374 = vunpack.c.l.b16 %v198
        %v375 = vunpack.c.h.b16 %v198
        %v376 = vunpack.c.l.b16 %v199
        %v377 = vunpack.c.h.b16 %v199
        %v378 = vunpack.c.l.b16 %v200
        %v379 = vunpack.c.h.b16 %v200
        %v380 = vunpack.c.l.b16 %v201
        %v381 = vunpack.c.h.b16 %v201
        %v382 = vunpack.c.l.b16 %v202
        %v383 = vunpack.c.h.b16 %v202
        %v384 = vunpack.c.l.b16 %v203
        %v385 = vunpack.c.h.b16 %v203
        %v386 = vunpack.c.l.b16 %v204
        %v387 = vunpack.c.h.b16 %v204
        %v388 = vpack.c.b16 %v374, %v372
        %v389 = vpack.c.b16 %v375, %v373
        %v390 = vpack.c.b16 %v378, %v376
        %v391 = vpack.c.b16 %v379, %v377
        %v392 = vpack.c.b16 %v382, %v380
        %v393 = vpack.c.b16 %v383, %v381
        %v394 = vpack.c.b16 %v386, %v384
        %v395 = vpack.c.b16 %v387, %v385
        %vm404 = vcmask 523264
        %v406 = vsel %vm404, %v355, 0
        %408 = vmatprep.subr.bf16.mxu0 0
        %409 = vmatpush1.bf16.msra.mxu0 0
        %410 = vmatprep.subr.bf16.mxu0 0
        %411 = vmatpush1.bf16.msra.mxu0 0
        %412 = vmatprep.subr.bf16.mxu0 0
        %413 = vmatpush1.bf16.msra.mxu0 0
        %414 = vmatprep.subr.bf16.mxu0 0
        %415 = vmatpush1.bf16.msra.mxu0 0
        %416 = vmatprep.subr.bf16.mxu0 %v395
        %417 = vmatpush1.bf16.msra.mxu0 %v394
        %418 = vmatprep.subr.bf16.mxu0 %v393
        %419 = vmatpush1.bf16.msra.mxu0 %v392
        %420 = vmatprep.subr.bf16.mxu0 %v391
        %421 = vmatpush1.bf16.msra.mxu0 %v390
        %422 = vmatprep.subr.bf16.mxu0 %v389
        %423 = vmatpush1.bf16.msra.mxu0 %v388
        %424 = vmatprep.subr.bf16.mxu0 0
        %425 = vmatpush2.bf16.msra.mxu0 0
        %426 = vmatprep.subr.bf16.mxu0 0
        %427 = vmatpush2.bf16.msra.mxu0 0
        %428 = vmatprep.subr.bf16.mxu0 0
        %429 = vmatpush2.bf16.msra.mxu0 0
        %430 = vmatprep.subr.bf16.mxu0 0
        %431 = vmatpush2.bf16.msra.mxu0 0
        %432 = vmatprep.subr.bf16.mxu0 0
        %433 = vmatpush2.bf16.msra.mxu0 0
        %434 = vmatprep.subr.bf16.mxu0 0
        %435 = vmatpush2.bf16.msra.mxu0 0
        %436 = vmatprep.subr.bf16.mxu0 0
        %437 = vmatpush2.bf16.msra.mxu0 0
        %438 = vmatprep.subr.bf16.mxu0 0
        %439 = vmatpush2.bf16.msra.mxu0 0
        %440 = vmatprep.mubr.bf16.mxu0 0
        %441 = vmatmul.mubr.bf16.gmra.mxu0 %v406
        %v442 = vpop.f32.mrf.mxu0
        %v443 = vadd.f32 %v359, %v442
        %v444 = vpop.f32.mrf.mxu0
        %v445 = vadd.f32 %v363, %v444
        %v446 = vpop.f32.mrf.mxu0
        %v447 = vadd.f32 %v359, %v446
        %v448 = vpop.f32.mrf.mxu0
        %v449 = vadd.f32 %v363, %v448
        %450 = vdwg.mxu0
        %v459 = vunpack.c.l.b16 %v205
        %v460 = vunpack.c.h.b16 %v205
        %v461 = vunpack.c.l.b16 %v206
        %v462 = vunpack.c.h.b16 %v206
        %v463 = vunpack.c.l.b16 %v207
        %v464 = vunpack.c.h.b16 %v207
        %v465 = vunpack.c.l.b16 %v208
        %v466 = vunpack.c.h.b16 %v208
        %v467 = vunpack.c.l.b16 %v209
        %v468 = vunpack.c.h.b16 %v209
        %v469 = vunpack.c.l.b16 %v210
        %v470 = vunpack.c.h.b16 %v210
        %v471 = vunpack.c.l.b16 %v211
        %v472 = vunpack.c.h.b16 %v211
        %v473 = vunpack.c.l.b16 %v212
        %v474 = vunpack.c.h.b16 %v212
        %v475 = vpack.c.b16 %v461, %v459
        %v476 = vpack.c.b16 %v462, %v460
        %v477 = vpack.c.b16 %v465, %v463
        %v478 = vpack.c.b16 %v466, %v464
        %v479 = vpack.c.b16 %v469, %v467
        %v480 = vpack.c.b16 %v470, %v468
        %v481 = vpack.c.b16 %v473, %v471
        %v482 = vpack.c.b16 %v474, %v472
        %v492 = vsel %vm404, 0, 0
        %494 = vmatprep.subr.bf16.mxu0 0
        %495 = vmatpush1.bf16.msra.mxu0 0
        %496 = vmatprep.subr.bf16.mxu0 0
        %497 = vmatpush1.bf16.msra.mxu0 0
        %498 = vmatprep.subr.bf16.mxu0 0
        %499 = vmatpush1.bf16.msra.mxu0 0
        %500 = vmatprep.subr.bf16.mxu0 0
        %501 = vmatpush1.bf16.msra.mxu0 0
        %502 = vmatprep.subr.bf16.mxu0 %v482
        %503 = vmatpush1.bf16.msra.mxu0 %v481
        %504 = vmatprep.subr.bf16.mxu0 %v480
        %505 = vmatpush1.bf16.msra.mxu0 %v479
        %506 = vmatprep.subr.bf16.mxu0 %v478
        %507 = vmatpush1.bf16.msra.mxu0 %v477
        %508 = vmatprep.subr.bf16.mxu0 %v476
        %509 = vmatpush1.bf16.msra.mxu0 %v475
        %510 = vmatprep.subr.bf16.mxu0 0
        %511 = vmatpush2.bf16.msra.mxu0 0
        %512 = vmatprep.subr.bf16.mxu0 0
        %513 = vmatpush2.bf16.msra.mxu0 0
        %514 = vmatprep.subr.bf16.mxu0 0
        %515 = vmatpush2.bf16.msra.mxu0 0
        %516 = vmatprep.subr.bf16.mxu0 0
        %517 = vmatpush2.bf16.msra.mxu0 0
        %518 = vmatprep.subr.bf16.mxu0 0
        %519 = vmatpush2.bf16.msra.mxu0 0
        %520 = vmatprep.subr.bf16.mxu0 0
        %521 = vmatpush2.bf16.msra.mxu0 0
        %522 = vmatprep.subr.bf16.mxu0 0
        %523 = vmatpush2.bf16.msra.mxu0 0
        %524 = vmatprep.subr.bf16.mxu0 0
        %525 = vmatpush2.bf16.msra.mxu0 0
        %526 = vmatprep.mubr.bf16.mxu0 0
        %527 = vmatmul.mubr.bf16.gmra.mxu0 %v492
        %v528 = vpop.f32.mrf.mxu0
        %v529 = vadd.f32 0.0, %v528
        %v530 = vpop.f32.mrf.mxu0
        %v531 = vadd.f32 0.0, %v530
        %v532 = vpop.f32.mrf.mxu0
        %v533 = vpop.f32.mrf.mxu0
        %534 = vdwg.mxu0
        %v535 = vadd.f32 %v443, %v529
        %v536 = vadd.f32 %v445, %v531
        %v537 = vxor.u32 %v535, 2147483648
        %v538 = vxor.u32 %v536, 2147483648
        %v539 = vmul.f32 %v537, 1.442695
        %v540 = vpow.pop %v539
        %v541 = vmul.f32 %v538, 1.442695
        %v542 = vpow.pop %v541
        %v543 = vadd.f32 %v540, 1.0
        %v544 = vadd.f32 %v542, 1.0
        %v545 = vrcp.pop %v543
        %v546 = vmul.f32 1.0, %v545
        %v547 = vrcp.pop %v544
        %v548 = vmul.f32 1.0, %v547
        %v549 = vtanh.pop %v536
        %v550 = vmul.f32 %v546, 0.0
        %v551 = vmul.f32 %v546, %v549
        %553 = vrot.lane.b32.xlu0 %v551, 64
        %v554 = vpop.permute.xlu0 %553
        %v556 = vadd.f32 %v550, %v554
        %v557 = vtanh.pop %v556
        %v558 = vmul.f32 %v548, %v557
        %v559 = vpack.c.bf16 %v558, %v558
        %561 = vrot.lane.b32.xlu0 %v559, 64
        %v562 = vpop.permute.xlu0 %561
        %v564 = vsel %vm404, %v562, 0
        %566 = vmatprep.subr.bf16.mxu0 0
        %567 = vmatpush1.bf16.msra.mxu0 0
        %568 = vmatprep.subr.bf16.mxu0 0
        %569 = vmatpush1.bf16.msra.mxu0 0
        %570 = vmatprep.subr.bf16.mxu0 0
        %571 = vmatpush1.bf16.msra.mxu0 0
        %572 = vmatprep.subr.bf16.mxu0 0
        %573 = vmatpush1.bf16.msra.mxu0 0
        %574 = vmatprep.subr.bf16.mxu0 %v482
        %575 = vmatpush1.bf16.msra.mxu0 %v481
        %576 = vmatprep.subr.bf16.mxu0 %v480
        %577 = vmatpush1.bf16.msra.mxu0 %v479
        %578 = vmatprep.subr.bf16.mxu0 %v478
        %579 = vmatpush1.bf16.msra.mxu0 %v477
        %580 = vmatprep.subr.bf16.mxu0 %v476
        %581 = vmatpush1.bf16.msra.mxu0 %v475
        %582 = vmatprep.subr.bf16.mxu0 0
        %583 = vmatpush2.bf16.msra.mxu0 0
        %584 = vmatprep.subr.bf16.mxu0 0
        %585 = vmatpush2.bf16.msra.mxu0 0
        %586 = vmatprep.subr.bf16.mxu0 0
        %587 = vmatpush2.bf16.msra.mxu0 0
        %588 = vmatprep.subr.bf16.mxu0 0
        %589 = vmatpush2.bf16.msra.mxu0 0
        %590 = vmatprep.subr.bf16.mxu0 0
        %591 = vmatpush2.bf16.msra.mxu0 0
        %592 = vmatprep.subr.bf16.mxu0 0
        %593 = vmatpush2.bf16.msra.mxu0 0
        %594 = vmatprep.subr.bf16.mxu0 0
        %595 = vmatpush2.bf16.msra.mxu0 0
        %596 = vmatprep.subr.bf16.mxu0 0
        %597 = vmatpush2.bf16.msra.mxu0 0
        %598 = vmatprep.mubr.bf16.mxu0 0
        %599 = vmatmul.mubr.bf16.gmra.mxu0 %v564
        %v600 = vpop.f32.mrf.mxu0
        %v601 = vadd.f32 0.0, %v600
        %v602 = vpop.f32.mrf.mxu0
        %v603 = vadd.f32 0.0, %v602
        %v604 = vpop.f32.mrf.mxu0
        %v605 = vpop.f32.mrf.mxu0
        %606 = vdwg.mxu0
        %v609 = vrot.slane %v601, 6
        %v610 = vrot.slane %v603, 6
        %v613 = vadd.f32 %v443, %v609
        %v614 = vadd.f32 %v445, %v610
        %v615 = vxor.u32 %v613, 2147483648
        %v616 = vxor.u32 %v614, 2147483648
        %v617 = vmul.f32 %v615, 1.442695
        %v618 = vpow.pop %v617
        %v619 = vmul.f32 %v616, 1.442695
        %v620 = vpow.pop %v619
        %v621 = vadd.f32 %v618, 1.0
        %v622 = vadd.f32 %v620, 1.0
        %v623 = vrcp.pop %v621
        %v624 = vmul.f32 1.0, %v623
        %v625 = vrcp.pop %v622
        %v626 = vmul.f32 1.0, %v625
        %v627 = vtanh.pop %v614
        %v629 = vrot.slane %v556, 6
        %v631 = vmul.f32 %v624, %v629
        %v632 = vmul.f32 %v624, %v627
        %634 = vrot.lane.b32.xlu0 %v632, 64
        %v635 = vpop.permute.xlu0 %634
        %v637 = vadd.f32 %v631, %v635
        %v638 = vtanh.pop %v637
        %v639 = vmul.f32 %v626, %v638
        %v640 = vpack.c.bf16 %v639, %v639
        %v642 = vrot.slane %v640, 1
        %643 = vrot.lane.b32.xlu0 %v642, 64
        %v644 = vpop.permute.xlu0 %643
        %v646 = vsel %vm404, %v644, 0
        %648 = vmatprep.subr.bf16.mxu0 0
        %649 = vmatpush1.bf16.msra.mxu0 0
        %650 = vmatprep.subr.bf16.mxu0 0
        %651 = vmatpush1.bf16.msra.mxu0 0
        %652 = vmatprep.subr.bf16.mxu0 0
        %653 = vmatpush1.bf16.msra.mxu0 0
        %654 = vmatprep.subr.bf16.mxu0 0
        %655 = vmatpush1.bf16.msra.mxu0 0
        %656 = vmatprep.subr.bf16.mxu0 %v482
        %657 = vmatpush1.bf16.msra.mxu0 %v481
        %658 = vmatprep.subr.bf16.mxu0 %v480
        %659 = vmatpush1.bf16.msra.mxu0 %v479
        %660 = vmatprep.subr.bf16.mxu0 %v478
        %661 = vmatpush1.bf16.msra.mxu0 %v477
        %662 = vmatprep.subr.bf16.mxu0 %v476
        %663 = vmatpush1.bf16.msra.mxu0 %v475
        %664 = vmatprep.subr.bf16.mxu0 0
        %665 = vmatpush2.bf16.msra.mxu0 0
        %666 = vmatprep.subr.bf16.mxu0 0
        %667 = vmatpush2.bf16.msra.mxu0 0
        %668 = vmatprep.subr.bf16.mxu0 0
        %669 = vmatpush2.bf16.msra.mxu0 0
        %670 = vmatprep.subr.bf16.mxu0 0
        %671 = vmatpush2.bf16.msra.mxu0 0
        %672 = vmatprep.subr.bf16.mxu0 0
        %673 = vmatpush2.bf16.msra.mxu0 0
        %674 = vmatprep.subr.bf16.mxu0 0
        %675 = vmatpush2.bf16.msra.mxu0 0
        %676 = vmatprep.subr.bf16.mxu0 0
        %677 = vmatpush2.bf16.msra.mxu0 0
        %678 = vmatprep.subr.bf16.mxu0 0
        %679 = vmatpush2.bf16.msra.mxu0 0
        %680 = vmatprep.mubr.bf16.mxu0 0
        %681 = vmatmul.mubr.bf16.gmra.mxu0 %v646
        %v682 = vpop.f32.mrf.mxu0
        %v683 = vadd.f32 0.0, %v682
        %v684 = vpop.f32.mrf.mxu0
        %v685 = vadd.f32 0.0, %v684
        %v686 = vpop.f32.mrf.mxu0
        %v687 = vpop.f32.mrf.mxu0
        %688 = vdwg.mxu0
        %v691 = vrot.slane %v683, 4
        %v692 = vrot.slane %v685, 4
        %v695 = vadd.f32 %v443, %v691
        %v696 = vadd.f32 %v445, %v692
        %v697 = vxor.u32 %v695, 2147483648
        %v698 = vxor.u32 %v696, 2147483648
        %v699 = vmul.f32 %v697, 1.442695
        %v700 = vpow.pop %v699
        %v701 = vmul.f32 %v698, 1.442695
        %v702 = vpow.pop %v701
        %v703 = vadd.f32 %v700, 1.0
        %v704 = vadd.f32 %v702, 1.0
        %v705 = vrcp.pop %v703
        %v706 = vmul.f32 1.0, %v705
        %v707 = vrcp.pop %v704
        %v708 = vmul.f32 1.0, %v707
        %v709 = vtanh.pop %v696
        %v711 = vrot.slane %v637, 6
        %v713 = vmul.f32 %v706, %v711
        %v714 = vmul.f32 %v706, %v709
        %716 = vrot.lane.b32.xlu0 %v714, 64
        %v717 = vpop.permute.xlu0 %716
        %v719 = vadd.f32 %v713, %v717
        %v720 = vtanh.pop %v719
        %v721 = vmul.f32 %v708, %v720
        %v722 = vpack.c.bf16 %v721, %v721
        %v724 = vrot.slane %v722, 2
        %725 = vrot.lane.b32.xlu0 %v724, 64
        %v726 = vpop.permute.xlu0 %725
        %v728 = vsel %vm404, %v726, 0
        %730 = vmatprep.subr.bf16.mxu0 0
        %731 = vmatpush1.bf16.msra.mxu0 0
        %732 = vmatprep.subr.bf16.mxu0 0
        %733 = vmatpush1.bf16.msra.mxu0 0
        %734 = vmatprep.subr.bf16.mxu0 0
        %735 = vmatpush1.bf16.msra.mxu0 0
        %736 = vmatprep.subr.bf16.mxu0 0
        %737 = vmatpush1.bf16.msra.mxu0 0
        %738 = vmatprep.subr.bf16.mxu0 %v482
        %739 = vmatpush1.bf16.msra.mxu0 %v481
        %740 = vmatprep.subr.bf16.mxu0 %v480
        %741 = vmatpush1.bf16.msra.mxu0 %v479
        %742 = vmatprep.subr.bf16.mxu0 %v478
        %743 = vmatpush1.bf16.msra.mxu0 %v477
        %744 = vmatprep.subr.bf16.mxu0 %v476
        %745 = vmatpush1.bf16.msra.mxu0 %v475
        %746 = vmatprep.subr.bf16.mxu0 0
        %747 = vmatpush2.bf16.msra.mxu0 0
        %748 = vmatprep.subr.bf16.mxu0 0
        %749 = vmatpush2.bf16.msra.mxu0 0
        %750 = vmatprep.subr.bf16.mxu0 0
        %751 = vmatpush2.bf16.msra.mxu0 0
        %752 = vmatprep.subr.bf16.mxu0 0
        %753 = vmatpush2.bf16.msra.mxu0 0
        %754 = vmatprep.subr.bf16.mxu0 0
        %755 = vmatpush2.bf16.msra.mxu0 0
        %756 = vmatprep.subr.bf16.mxu0 0
        %757 = vmatpush2.bf16.msra.mxu0 0
        %758 = vmatprep.subr.bf16.mxu0 0
        %759 = vmatpush2.bf16.msra.mxu0 0
        %760 = vmatprep.subr.bf16.mxu0 0
        %761 = vmatpush2.bf16.msra.mxu0 0
        %762 = vmatprep.mubr.bf16.mxu0 0
        %763 = vmatmul.mubr.bf16.gmra.mxu0 %v728
        %v764 = vpop.f32.mrf.mxu0
        %v765 = vadd.f32 0.0, %v764
        %v766 = vpop.f32.mrf.mxu0
        %v767 = vadd.f32 0.0, %v766
        %v768 = vpop.f32.mrf.mxu0
        %v769 = vpop.f32.mrf.mxu0
        %770 = vdwg.mxu0
        %v773 = vrot.slane %v765, 2
        %v774 = vrot.slane %v767, 2
        %v777 = vadd.f32 %v443, %v773
        %v778 = vadd.f32 %v445, %v774
        %v779 = vxor.u32 %v777, 2147483648
        %v780 = vxor.u32 %v778, 2147483648
        %v781 = vmul.f32 %v779, 1.442695
        %v782 = vpow.pop %v781
        %v783 = vmul.f32 %v780, 1.442695
        %v784 = vpow.pop %v783
        %v785 = vadd.f32 %v782, 1.0
        %v786 = vadd.f32 %v784, 1.0
        %v787 = vrcp.pop %v785
        %v788 = vmul.f32 1.0, %v787
        %v789 = vrcp.pop %v786
        %v790 = vmul.f32 1.0, %v789
        %v791 = vtanh.pop %v778
        %v793 = vrot.slane %v719, 6
        %v795 = vmul.f32 %v788, %v793
        %v796 = vmul.f32 %v788, %v791
        %798 = vrot.lane.b32.xlu0 %v796, 64
        %v799 = vpop.permute.xlu0 %798
        %v801 = vadd.f32 %v795, %v799
        %v802 = vtanh.pop %v801
        %v803 = vmul.f32 %v790, %v802
        %v804 = vpack.c.bf16 %v803, %v803
        %v806 = vrot.slane %v804, 3
        %807 = vrot.lane.b32.xlu0 %v806, 64
        %v808 = vpop.permute.xlu0 %807
        %v810 = vsel %vm404, %v808, 0
        %812 = vmatprep.subr.bf16.mxu0 0
        %813 = vmatpush1.bf16.msra.mxu0 0
        %814 = vmatprep.subr.bf16.mxu0 0
        %815 = vmatpush1.bf16.msra.mxu0 0
        %816 = vmatprep.subr.bf16.mxu0 0
        %817 = vmatpush1.bf16.msra.mxu0 0
        %818 = vmatprep.subr.bf16.mxu0 0
        %819 = vmatpush1.bf16.msra.mxu0 0
        %820 = vmatprep.subr.bf16.mxu0 %v482
        %821 = vmatpush1.bf16.msra.mxu0 %v481
        %822 = vmatprep.subr.bf16.mxu0 %v480
        %823 = vmatpush1.bf16.msra.mxu0 %v479
        %824 = vmatprep.subr.bf16.mxu0 %v478
        %825 = vmatpush1.bf16.msra.mxu0 %v477
        %826 = vmatprep.subr.bf16.mxu0 %v476
        %827 = vmatpush1.bf16.msra.mxu0 %v475
        %828 = vmatprep.subr.bf16.mxu0 0
        %829 = vmatpush2.bf16.msra.mxu0 0
        %830 = vmatprep.subr.bf16.mxu0 0
        %831 = vmatpush2.bf16.msra.mxu0 0
        %832 = vmatprep.subr.bf16.mxu0 0
        %833 = vmatpush2.bf16.msra.mxu0 0
        %834 = vmatprep.subr.bf16.mxu0 0
        %835 = vmatpush2.bf16.msra.mxu0 0
        %836 = vmatprep.subr.bf16.mxu0 0
        %837 = vmatpush2.bf16.msra.mxu0 0
        %838 = vmatprep.subr.bf16.mxu0 0
        %839 = vmatpush2.bf16.msra.mxu0 0
        %840 = vmatprep.subr.bf16.mxu0 0
        %841 = vmatpush2.bf16.msra.mxu0 0
        %842 = vmatprep.subr.bf16.mxu0 0
        %843 = vmatpush2.bf16.msra.mxu0 0
        %844 = vmatprep.mubr.bf16.mxu0 0
        %845 = vmatmul.mubr.bf16.gmra.mxu0 %v810
        %v846 = vpop.f32.mrf.mxu0
        %v847 = vadd.f32 0.0, %v846
        %v848 = vpop.f32.mrf.mxu0
        %v849 = vadd.f32 0.0, %v848
        %v850 = vpop.f32.mrf.mxu0
        %v851 = vpop.f32.mrf.mxu0
        %852 = vdwg.mxu0
        %v853 = vadd.f32 %v447, %v847
        %v854 = vadd.f32 %v449, %v849
        %v855 = vxor.u32 %v853, 2147483648
        %v856 = vxor.u32 %v854, 2147483648
        %v857 = vmul.f32 %v855, 1.442695
        %v858 = vpow.pop %v857
        %v859 = vmul.f32 %v856, 1.442695
        %v860 = vpow.pop %v859
        %v861 = vadd.f32 %v858, 1.0
        %v862 = vadd.f32 %v860, 1.0
        %v863 = vrcp.pop %v861
        %v864 = vmul.f32 1.0, %v863
        %v865 = vrcp.pop %v862
        %v866 = vmul.f32 1.0, %v865
        %v867 = vtanh.pop %v854
        %v869 = vrot.slane %v801, 6
        %v871 = vmul.f32 %v864, %v869
        %v872 = vmul.f32 %v864, %v867
        %874 = vrot.lane.b32.xlu0 %v872, 64
        %v875 = vpop.permute.xlu0 %874
        %v877 = vadd.f32 %v871, %v875
        %v878 = vtanh.pop %v877
        %v879 = vmul.f32 %v866, %v878
        %v880 = vpack.c.bf16 %v879, %v879
        %882 = vrot.lane.b32.xlu0 %v880, 64
        %v883 = vpop.permute.xlu0 %882
        %v885 = vsel %vm404, %v883, 0
        %887 = vmatprep.subr.bf16.mxu0 0
        %888 = vmatpush1.bf16.msra.mxu0 0
        %889 = vmatprep.subr.bf16.mxu0 0
        %890 = vmatpush1.bf16.msra.mxu0 0
        %891 = vmatprep.subr.bf16.mxu0 0
        %892 = vmatpush1.bf16.msra.mxu0 0
        %893 = vmatprep.subr.bf16.mxu0 0
        %894 = vmatpush1.bf16.msra.mxu0 0
        %895 = vmatprep.subr.bf16.mxu0 %v482
        %896 = vmatpush1.bf16.msra.mxu0 %v481
        %897 = vmatprep.subr.bf16.mxu0 %v480
        %898 = vmatpush1.bf16.msra.mxu0 %v479
        %899 = vmatprep.subr.bf16.mxu0 %v478
        %900 = vmatpush1.bf16.msra.mxu0 %v477
        %901 = vmatprep.subr.bf16.mxu0 %v476
        %902 = vmatpush1.bf16.msra.mxu0 %v475
        %903 = vmatprep.subr.bf16.mxu0 0
        %904 = vmatpush2.bf16.msra.mxu0 0
        %905 = vmatprep.subr.bf16.mxu0 0
        %906 = vmatpush2.bf16.msra.mxu0 0
        %907 = vmatprep.subr.bf16.mxu0 0
        %908 = vmatpush2.bf16.msra.mxu0 0
        %909 = vmatprep.subr.bf16.mxu0 0
        %910 = vmatpush2.bf16.msra.mxu0 0
        %911 = vmatprep.subr.bf16.mxu0 0
        %912 = vmatpush2.bf16.msra.mxu0 0
        %913 = vmatprep.subr.bf16.mxu0 0
        %914 = vmatpush2.bf16.msra.mxu0 0
        %915 = vmatprep.subr.bf16.mxu0 0
        %916 = vmatpush2.bf16.msra.mxu0 0
        %917 = vmatprep.subr.bf16.mxu0 0
        %918 = vmatpush2.bf16.msra.mxu0 0
        %919 = vmatprep.mubr.bf16.mxu0 0
        %920 = vmatmul.mubr.bf16.gmra.mxu0 %v885
        %v921 = vpop.f32.mrf.mxu0
        %v922 = vadd.f32 0.0, %v921
        %v923 = vpop.f32.mrf.mxu0
        %v924 = vadd.f32 0.0, %v923
        %v925 = vpop.f32.mrf.mxu0
        %v926 = vpop.f32.mrf.mxu0
        %927 = vdwg.mxu0
        %v930 = vrot.slane %v922, 6
        %v931 = vrot.slane %v924, 6
        %v934 = vadd.f32 %v447, %v930
        %v935 = vadd.f32 %v449, %v931
        %v936 = vxor.u32 %v934, 2147483648
        %v937 = vxor.u32 %v935, 2147483648
        %v938 = vmul.f32 %v936, 1.442695
        %v939 = vpow.pop %v938
        %v940 = vmul.f32 %v937, 1.442695
        %v941 = vpow.pop %v940
        %v942 = vadd.f32 %v939, 1.0
        %v943 = vadd.f32 %v941, 1.0
        %v944 = vrcp.pop %v942
        %v945 = vmul.f32 1.0, %v944
        %v946 = vrcp.pop %v943
        %v947 = vmul.f32 1.0, %v946
        %v948 = vtanh.pop %v935
        %v950 = vrot.slane %v877, 6
        %v952 = vmul.f32 %v945, %v950
        %v953 = vmul.f32 %v945, %v948
        %955 = vrot.lane.b32.xlu0 %v953, 64
        %v956 = vpop.permute.xlu0 %955
        %v958 = vadd.f32 %v952, %v956
        %v959 = vtanh.pop %v958
        %v960 = vmul.f32 %v947, %v959
        %v961 = vpack.c.bf16 %v960, %v960
        %v963 = vrot.slane %v961, 1
        %964 = vrot.lane.b32.xlu0 %v963, 64
        %v965 = vpop.permute.xlu0 %964
        %v967 = vsel %vm404, %v965, 0
        %969 = vmatprep.subr.bf16.mxu0 0
        %970 = vmatpush1.bf16.msra.mxu0 0
        %971 = vmatprep.subr.bf16.mxu0 0
        %972 = vmatpush1.bf16.msra.mxu0 0
        %973 = vmatprep.subr.bf16.mxu0 0
        %974 = vmatpush1.bf16.msra.mxu0 0
        %975 = vmatprep.subr.bf16.mxu0 0
        %976 = vmatpush1.bf16.msra.mxu0 0
        %977 = vmatprep.subr.bf16.mxu0 %v482
        %978 = vmatpush1.bf16.msra.mxu0 %v481
        %979 = vmatprep.subr.bf16.mxu0 %v480
        %980 = vmatpush1.bf16.msra.mxu0 %v479
        %981 = vmatprep.subr.bf16.mxu0 %v478
        %982 = vmatpush1.bf16.msra.mxu0 %v477
        %983 = vmatprep.subr.bf16.mxu0 %v476
        %984 = vmatpush1.bf16.msra.mxu0 %v475
        %985 = vmatprep.subr.bf16.mxu0 0
        %986 = vmatpush2.bf16.msra.mxu0 0
        %987 = vmatprep.subr.bf16.mxu0 0
        %988 = vmatpush2.bf16.msra.mxu0 0
        %989 = vmatprep.subr.bf16.mxu0 0
        %990 = vmatpush2.bf16.msra.mxu0 0
        %991 = vmatprep.subr.bf16.mxu0 0
        %992 = vmatpush2.bf16.msra.mxu0 0
        %993 = vmatprep.subr.bf16.mxu0 0
        %994 = vmatpush2.bf16.msra.mxu0 0
        %995 = vmatprep.subr.bf16.mxu0 0
        %996 = vmatpush2.bf16.msra.mxu0 0
        %997 = vmatprep.subr.bf16.mxu0 0
        %998 = vmatpush2.bf16.msra.mxu0 0
        %999 = vmatprep.subr.bf16.mxu0 0
        %1000 = vmatpush2.bf16.msra.mxu0 0
        %1001 = vmatprep.mubr.bf16.mxu0 0
        %1002 = vmatmul.mubr.bf16.gmra.mxu0 %v967
        %v1003 = vpop.f32.mrf.mxu0
        %v1004 = vadd.f32 0.0, %v1003
        %v1005 = vpop.f32.mrf.mxu0
        %v1006 = vadd.f32 0.0, %v1005
        %v1007 = vpop.f32.mrf.mxu0
        %v1008 = vpop.f32.mrf.mxu0
        %1009 = vdwg.mxu0
        %v1012 = vrot.slane %v1004, 4
        %v1013 = vrot.slane %v1006, 4
        %v1016 = vadd.f32 %v447, %v1012
        %v1017 = vadd.f32 %v449, %v1013
        %v1018 = vxor.u32 %v1016, 2147483648
        %v1019 = vxor.u32 %v1017, 2147483648
        %v1020 = vmul.f32 %v1018, 1.442695
        %v1021 = vpow.pop %v1020
        %v1022 = vmul.f32 %v1019, 1.442695
        %v1023 = vpow.pop %v1022
        %v1024 = vadd.f32 %v1021, 1.0
        %v1025 = vadd.f32 %v1023, 1.0
        %v1026 = vrcp.pop %v1024
        %v1027 = vmul.f32 1.0, %v1026
        %v1028 = vrcp.pop %v1025
        %v1029 = vmul.f32 1.0, %v1028
        %v1030 = vtanh.pop %v1017
        %v1032 = vrot.slane %v958, 6
        %v1034 = vmul.f32 %v1027, %v1032
        %v1035 = vmul.f32 %v1027, %v1030
        %1037 = vrot.lane.b32.xlu0 %v1035, 64
        %v1038 = vpop.permute.xlu0 %1037
        %v1040 = vadd.f32 %v1034, %v1038
        %v1041 = vtanh.pop %v1040
        %v1042 = vmul.f32 %v1029, %v1041
        %v1043 = vpack.c.bf16 %v1042, %v1042
        %v1045 = vrot.slane %v1043, 2
        %1046 = vrot.lane.b32.xlu0 %v1045, 64
        %v1047 = vpop.permute.xlu0 %1046
        %v1049 = vsel %vm404, %v1047, 0
        %1051 = vmatprep.subr.bf16.mxu0 0
        %1052 = vmatpush1.bf16.msra.mxu0 0
        %1053 = vmatprep.subr.bf16.mxu0 0
        %1054 = vmatpush1.bf16.msra.mxu0 0
        %1055 = vmatprep.subr.bf16.mxu0 0
        %1056 = vmatpush1.bf16.msra.mxu0 0
        %1057 = vmatprep.subr.bf16.mxu0 0
        %1058 = vmatpush1.bf16.msra.mxu0 0
        %1059 = vmatprep.subr.bf16.mxu0 %v482
        %1060 = vmatpush1.bf16.msra.mxu0 %v481
        %1061 = vmatprep.subr.bf16.mxu0 %v480
        %1062 = vmatpush1.bf16.msra.mxu0 %v479
        %1063 = vmatprep.subr.bf16.mxu0 %v478
        %1064 = vmatpush1.bf16.msra.mxu0 %v477
        %1065 = vmatprep.subr.bf16.mxu0 %v476
        %1066 = vmatpush1.bf16.msra.mxu0 %v475
        %1067 = vmatprep.subr.bf16.mxu0 0
        %1068 = vmatpush2.bf16.msra.mxu0 0
        %1069 = vmatprep.subr.bf16.mxu0 0
        %1070 = vmatpush2.bf16.msra.mxu0 0
        %1071 = vmatprep.subr.bf16.mxu0 0
        %1072 = vmatpush2.bf16.msra.mxu0 0
        %1073 = vmatprep.subr.bf16.mxu0 0
        %1074 = vmatpush2.bf16.msra.mxu0 0
        %1075 = vmatprep.subr.bf16.mxu0 0
        %1076 = vmatpush2.bf16.msra.mxu0 0
        %1077 = vmatprep.subr.bf16.mxu0 0
        %1078 = vmatpush2.bf16.msra.mxu0 0
        %1079 = vmatprep.subr.bf16.mxu0 0
        %1080 = vmatpush2.bf16.msra.mxu0 0
        %1081 = vmatprep.subr.bf16.mxu0 0
        %1082 = vmatpush2.bf16.msra.mxu0 0
        %1083 = vmatprep.mubr.bf16.mxu0 0
        %1084 = vmatmul.mubr.bf16.gmra.mxu0 %v1049
        %v1085 = vpop.f32.mrf.mxu0
        %v1086 = vadd.f32 0.0, %v1085
        %v1087 = vpop.f32.mrf.mxu0
        %v1088 = vadd.f32 0.0, %v1087
        %v1089 = vpop.f32.mrf.mxu0
        %v1090 = vpop.f32.mrf.mxu0
        %1091 = vdwg.mxu0
        %v1094 = vrot.slane %v1086, 2
        %v1095 = vrot.slane %v1088, 2
        %v1098 = vadd.f32 %v447, %v1094
        %v1099 = vadd.f32 %v449, %v1095
        %v1100 = vxor.u32 %v1098, 2147483648
        %v1101 = vxor.u32 %v1099, 2147483648
        %v1102 = vmul.f32 %v1100, 1.442695
        %v1103 = vpow.pop %v1102
        %v1104 = vmul.f32 %v1101, 1.442695
        %v1105 = vpow.pop %v1104
        %v1106 = vadd.f32 %v1103, 1.0
        %v1107 = vadd.f32 %v1105, 1.0
        %v1108 = vrcp.pop %v1106
        %v1109 = vmul.f32 1.0, %v1108
        %v1110 = vrcp.pop %v1107
        %v1111 = vmul.f32 1.0, %v1110
        %v1112 = vtanh.pop %v1099
        %v1114 = vrot.slane %v1040, 6
        %v1116 = vmul.f32 %v1109, %v1114
        %v1117 = vmul.f32 %v1109, %v1112
        %1119 = vrot.lane.b32.xlu0 %v1117, 64
        %v1120 = vpop.permute.xlu0 %1119
        %v1122 = vadd.f32 %v1116, %v1120
        %v1123 = vtanh.pop %v1122
        %v1124 = vmul.f32 %v1111, %v1123
        %v1125 = vpack.c.bf16 %v1124, %v1124
        %v1126 = vld [vmem:[%s192] sm:$0x1]
        %v1128 = vshrl.u32 %v1125, 16
        %v1130 = vrot.slane %v1128, 3
        %1131 = vrot.lane.b32.xlu0 %v1130, 64
        %v1132 = vpop.permute.xlu0 %1131
        %1133 = vrot.lane.b32.xlu0 %v300, 64
        %v1134 = vpop.permute.xlu0 %1133
        %1135 = vrot.lane.b32.xlu0 %v301, 64
        %v1136 = vpop.permute.xlu0 %1135
        %1137 = vrot.lane.b32.xlu0 %v302, 64
        %v1138 = vpop.permute.xlu0 %1137
        %1139 = vrot.lane.b32.xlu0 %v303, 64
        %v1140 = vpop.permute.xlu0 %1139
        %v1146 = vsel %vm404, %v1132, 0
        %1148 = vmatprep.subr.bf16.mxu0 0
        %1149 = vmatpush1.bf16.msra.mxu0 0
        %1150 = vmatprep.subr.bf16.mxu0 0
        %1151 = vmatpush1.bf16.msra.mxu0 0
        %1152 = vmatprep.subr.bf16.mxu0 0
        %1153 = vmatpush1.bf16.msra.mxu0 0
        %1154 = vmatprep.subr.bf16.mxu0 0
        %1155 = vmatpush1.bf16.msra.mxu0 0
        %1156 = vmatprep.subr.bf16.mxu0 0
        %1157 = vmatpush1.bf16.msra.mxu0 %v1140
        %1158 = vmatprep.subr.bf16.mxu0 0
        %1159 = vmatpush1.bf16.msra.mxu0 %v1138
        %1160 = vmatprep.subr.bf16.mxu0 0
        %1161 = vmatpush1.bf16.msra.mxu0 %v1136
        %1162 = vmatprep.subr.bf16.mxu0 0
        %1163 = vmatpush1.bf16.msra.mxu0 %v1134
        %1164 = vmatprep.subr.bf16.mxu0 0
        %1165 = vmatpush2.bf16.msra.mxu0 0
        %1166 = vmatprep.subr.bf16.mxu0 0
        %1167 = vmatpush2.bf16.msra.mxu0 0
        %1168 = vmatprep.subr.bf16.mxu0 0
        %1169 = vmatpush2.bf16.msra.mxu0 0
        %1170 = vmatprep.subr.bf16.mxu0 0
        %1171 = vmatpush2.bf16.msra.mxu0 0
        %1172 = vmatprep.subr.bf16.mxu0 0
        %1173 = vmatpush2.bf16.msra.mxu0 0
        %1174 = vmatprep.subr.bf16.mxu0 0
        %1175 = vmatpush2.bf16.msra.mxu0 0
        %1176 = vmatprep.subr.bf16.mxu0 0
        %1177 = vmatpush2.bf16.msra.mxu0 0
        %1178 = vmatprep.subr.bf16.mxu0 0
        %1179 = vmatpush2.bf16.msra.mxu0 0
        %1180 = vmatprep.mubr.bf16.mxu0 0
        %1181 = vmatmul.mubr.bf16.gmra.mxu0 %v1146
        %v1182 = vpop.f32.mrf.mxu0
        %v1183 = vadd.f32 0.0, %v1182
        %v1184 = vpop.f32.mrf.mxu0
        %v1185 = vpop.f32.mrf.mxu0
        %v1186 = vpop.f32.mrf.mxu0
        %1187 = vdwg.mxu0
        %v1189 = vrot.slane %v1125, 3
        %1190 = vrot.lane.b32.xlu0 %v1189, 64
        %v1191 = vpop.permute.xlu0 %1190
        %1192 = vrot.lane.b32.xlu0 %v296, 64
        %v1193 = vpop.permute.xlu0 %1192
        %1194 = vrot.lane.b32.xlu0 %v297, 64
        %v1195 = vpop.permute.xlu0 %1194
        %1196 = vrot.lane.b32.xlu0 %v298, 64
        %v1197 = vpop.permute.xlu0 %1196
        %1198 = vrot.lane.b32.xlu0 %v299, 64
        %v1199 = vpop.permute.xlu0 %1198
        %v1205 = vsel %vm404, %v1191, 0
        %1207 = vmatprep.subr.bf16.mxu0 0
        %1208 = vmatpush1.bf16.msra.mxu0 0
        %1209 = vmatprep.subr.bf16.mxu0 0
        %1210 = vmatpush1.bf16.msra.mxu0 0
        %1211 = vmatprep.subr.bf16.mxu0 0
        %1212 = vmatpush1.bf16.msra.mxu0 0
        %1213 = vmatprep.subr.bf16.mxu0 0
        %1214 = vmatpush1.bf16.msra.mxu0 0
        %1215 = vmatprep.subr.bf16.mxu0 0
        %1216 = vmatpush1.bf16.msra.mxu0 %v1199
        %1217 = vmatprep.subr.bf16.mxu0 0
        %1218 = vmatpush1.bf16.msra.mxu0 %v1197
        %1219 = vmatprep.subr.bf16.mxu0 0
        %1220 = vmatpush1.bf16.msra.mxu0 %v1195
        %1221 = vmatprep.subr.bf16.mxu0 0
        %1222 = vmatpush1.bf16.msra.mxu0 %v1193
        %1223 = vmatprep.subr.bf16.mxu0 0
        %1224 = vmatpush2.bf16.msra.mxu0 0
        %1225 = vmatprep.subr.bf16.mxu0 0
        %1226 = vmatpush2.bf16.msra.mxu0 0
        %1227 = vmatprep.subr.bf16.mxu0 0
        %1228 = vmatpush2.bf16.msra.mxu0 0
        %1229 = vmatprep.subr.bf16.mxu0 0
        %1230 = vmatpush2.bf16.msra.mxu0 0
        %1231 = vmatprep.subr.bf16.mxu0 0
        %1232 = vmatpush2.bf16.msra.mxu0 0
        %1233 = vmatprep.subr.bf16.mxu0 0
        %1234 = vmatpush2.bf16.msra.mxu0 0
        %1235 = vmatprep.subr.bf16.mxu0 0
        %1236 = vmatpush2.bf16.msra.mxu0 0
        %1237 = vmatprep.subr.bf16.mxu0 0
        %1238 = vmatpush2.bf16.msra.mxu0 0
        %1239 = vmatprep.mubr.bf16.mxu0 0
        %1240 = vmatmul.mubr.bf16.gmra.mxu0 %v1205
        %v1241 = vpop.f32.mrf.mxu0
        %v1242 = vadd.f32 %v1183, %v1241
        %v1243 = vpop.f32.mrf.mxu0
        %v1244 = vpop.f32.mrf.mxu0
        %v1245 = vpop.f32.mrf.mxu0
        %1246 = vdwg.mxu0
        %v1263 = vunpack.c.l.b16 %v234
        %v1264 = vunpack.c.l.b16 %v235
        %v1265 = vunpack.c.l.b16 %v236
        %v1266 = vunpack.c.l.b16 %v237
        %v1267 = vunpack.c.l.b16 %v238
        %v1268 = vunpack.c.l.b16 %v239
        %v1269 = vunpack.c.l.b16 %v240
        %v1270 = vunpack.c.l.b16 %v241
        %v1271 = vunpack.c.l.b16 %v242
        %v1272 = vunpack.c.l.b16 %v243
        %v1273 = vunpack.c.l.b16 %v244
        %v1274 = vunpack.c.l.b16 %v245
        %v1275 = vunpack.c.l.b16 %v246
        %v1276 = vunpack.c.l.b16 %v247
        %v1277 = vunpack.c.l.b16 %v248
        %v1278 = vunpack.c.l.b16 %v249
        %v1279 = vpack.c.b16 %v1264, %v1263
        %v1280 = vpack.c.b16 %v1266, %v1265
        %v1281 = vpack.c.b16 %v1268, %v1267
        %v1282 = vpack.c.b16 %v1270, %v1269
        %v1283 = vpack.c.b16 %v1272, %v1271
        %v1284 = vpack.c.b16 %v1274, %v1273
        %v1285 = vpack.c.b16 %v1276, %v1275
        %v1286 = vpack.c.b16 %v1278, %v1277
        %1287 = vrot.lane.b32.xlu0 %v1279, 64
        %v1288 = vpop.permute.xlu0 %1287
        %1289 = vrot.lane.b32.xlu0 %v1280, 64
        %v1290 = vpop.permute.xlu0 %1289
        %1291 = vrot.lane.b32.xlu0 %v1281, 64
        %v1292 = vpop.permute.xlu0 %1291
        %1293 = vrot.lane.b32.xlu0 %v1282, 64
        %v1294 = vpop.permute.xlu0 %1293
        %1295 = vrot.lane.b32.xlu0 %v1283, 64
        %v1296 = vpop.permute.xlu0 %1295
        %1297 = vrot.lane.b32.xlu0 %v1284, 64
        %v1298 = vpop.permute.xlu0 %1297
        %1299 = vrot.lane.b32.xlu0 %v1285, 64
        %v1300 = vpop.permute.xlu0 %1299
        %1301 = vrot.lane.b32.xlu0 %v1286, 64
        %v1302 = vpop.permute.xlu0 %1301
        %1311 = vmatprep.subr.bf16.mxu0 0
        %1312 = vmatpush1.bf16.msra.mxu0 %v1302
        %1313 = vmatprep.subr.bf16.mxu0 0
        %1314 = vmatpush1.bf16.msra.mxu0 %v1300
        %1315 = vmatprep.subr.bf16.mxu0 0
        %1316 = vmatpush1.bf16.msra.mxu0 %v1298
        %1317 = vmatprep.subr.bf16.mxu0 0
        %1318 = vmatpush1.bf16.msra.mxu0 %v1296
        %1319 = vmatprep.subr.bf16.mxu0 0
        %1320 = vmatpush1.bf16.msra.mxu0 %v1294
        %1321 = vmatprep.subr.bf16.mxu0 0
        %1322 = vmatpush1.bf16.msra.mxu0 %v1292
        %1323 = vmatprep.subr.bf16.mxu0 0
        %1324 = vmatpush1.bf16.msra.mxu0 %v1290
        %1325 = vmatprep.subr.bf16.mxu0 0
        %1326 = vmatpush1.bf16.msra.mxu0 %v1288
        %1327 = vmatprep.subr.bf16.mxu0 0
        %1328 = vmatpush2.bf16.msra.mxu0 0
        %1329 = vmatprep.subr.bf16.mxu0 0
        %1330 = vmatpush2.bf16.msra.mxu0 0
        %1331 = vmatprep.subr.bf16.mxu0 0
        %1332 = vmatpush2.bf16.msra.mxu0 0
        %1333 = vmatprep.subr.bf16.mxu0 0
        %1334 = vmatpush2.bf16.msra.mxu0 0
        %1335 = vmatprep.subr.bf16.mxu0 0
        %1336 = vmatpush2.bf16.msra.mxu0 0
        %1337 = vmatprep.subr.bf16.mxu0 0
        %1338 = vmatpush2.bf16.msra.mxu0 0
        %1339 = vmatprep.subr.bf16.mxu0 0
        %1340 = vmatpush2.bf16.msra.mxu0 0
        %1341 = vmatprep.subr.bf16.mxu0 0
        %1342 = vmatpush2.bf16.msra.mxu0 0
        %1343 = vmatprep.mubr.bf16.mxu0 0
        %1344 = vmatmul.mubr.bf16.gmra.mxu0 %v1126
        %v1345 = vpop.f32.mrf.mxu0
        %v1346 = vadd.f32 0.0, %v1345
        %v1347 = vpop.f32.mrf.mxu0
        %v1348 = vpop.f32.mrf.mxu0
        %v1349 = vpop.f32.mrf.mxu0
        %1350 = vdwg.mxu0
        %v1351 = vadd.f32 %v1242, %v1346
        %1353 = vrot.lane.b32.xlu0 %v251, 64
        %v1354 = vpop.permute.xlu0 %1353
        %v1356 = vadd.f32 %v1351, %v1354
        %vm1357 = vcmask 57344
        %1358 = vst.msk [vmem:[%s195] sm:$0x1] %vm1357, %v1356
        %p1359 = scmp.lt.s32.totalorder %s15, 3
        %s1360 = scalar_select %p1359, %s15, 3
        %s1361 = scalar_lea.vmem %s3, %s1360
        // Predicated region
        $region37: #{time_action_predict.1} parent=31 // pred_check
          %p1362 = pneg %p106
        $region38: #{time_action_predict.1} parent=31 // pred_check_branch
          %1364 = sbr.rel (%p1362) target = $region40
        $region39: #{time_action_predict.1} parent=31 // pred_region
          _
        $region40: #{time_action_predict.1} parent=31 // pred_fallthru
          _
      $region32: #{time_action_predict.1} parent=5 // pred_fallthru
        _
      %p1365 = scmp.le.s32.totalorder 2, %s10
      // Predicated region
      $region41: #{time_action_predict.1} parent=5 // pred_check
        %p1366 = pneg %p1365
      $region42: #{time_action_predict.1} parent=5 // pred_check_branch
        %1368 = sbr.rel (%p1366) target = $region44
      $region43: #{time_action_predict.1} parent=5 // pred_region
        %s1369 = ssub.s32 %s10, 2
        // Predicated region
        $region45: #{time_action_predict.1} parent=43 // pred_check
          %p1370 = pneg %p112
        $region46: #{time_action_predict.1} parent=43 // pred_check_branch
          %1372 = sbr.rel (%p1370) target = $region48
        $region47: #{time_action_predict.1} parent=43 // pred_region
          %p1373 = scmp.lt.s32.totalorder %s16, 3
          %s1374 = scalar_select %p1373, %s16, 3
          %s1375 = scalar_lea.vmem %s3, %s1374
        $region48: #{time_action_predict.1} parent=43 // pred_fallthru
          _
      $region44: #{time_action_predict.1} parent=5 // pred_fallthru
        _
    $region6: #{time_action_predict.1} parent=1 // loop_footer
      %s14 = sadd.s32 1, %s10
    $region7: #{time_action_predict.1} parent=1 // loop_footer_branch
      %9 = sbr.rel target = $region3
    $region8: #{time_action_predict.1} parent=1 // loop_exit
      _
    %1376 = vsyncpa [#allocation3], 1
    %s1377 = scalar_lea.sflag [#allocation3], 1
    %1378 = vsyncpa %s1377, 1

</llo_original>
